<compile_context>
chip_gen: v7x
topology: tpu7x:2x2x1
jax: 0.10.0
libtpu: 0.0.40
codegen_flags: <defaults>
</compile_context>

<pallas_src>
import jax
import jax.numpy as jnp
from jax import lax
from jax.experimental import pallas as pl
from jax.experimental.pallas import tpu as pltpu


LEAKY_SLOPE = 0.01
BN_EPS = 1e-5
LANE = 128  # TPU lane width; output padded to this for lane-dense stores.


def _leaky_relu(x):
    return jnp.where(x > 0, x, LEAKY_SLOPE * x)


def _batchnorm_train(x, gamma, beta):
    """Training-mode BatchNorm1d fused into one per-element FMA."""
    mean = jnp.mean(x, axis=0, keepdims=True)
    var = jnp.mean(jnp.square(x - mean), axis=0, keepdims=True)
    scale = gamma * lax.rsqrt(var + BN_EPS)     # (1, N) — cheap
    shift = beta - mean * scale                 # (1, N) — cheap
    return x * scale + shift                    # per-element FMA


def critic_kernel(state_ref, action_ref, w1_ref, w2s_ref, w2a_ref, w3_ref,
                  vec_ref, out_ref):
    state = state_ref[...]
    action = action_ref[...]

    # Unpack the small per-layer vectors (one 8x256 f32 DMA).
    # Layout (see pack_critic_params):
    #   row 0: b1 (256)
    #   row 1: [b2 | b3]
    #   row 2: [g2 | g3]
    #   row 3: [be2 | be3]
    #   row 4: [w4 row | b4, 0...]
    b1 = vec_ref[0:1, :]                      # (1, 256)
    b2 = vec_ref[1:2, :LANE]                  # (1, 128)
    b3 = vec_ref[1:2, LANE:]                  # (1, 128)
    g2 = vec_ref[2:3, :LANE]
    g3 = vec_ref[2:3, LANE:]
    be2 = vec_ref[3:4, :LANE]
    be3 = vec_ref[3:4, LANE:]
    w4r = vec_ref[4:5, :LANE]                 # fc4 weight as a row (1, 128)
    b4 = vec_ref[4:5, LANE:LANE + 1]          # (1, 1)

    wdt = w1_ref.dtype  # f32 by default; bf16 if weights were packed as bf16.

    # fc1 + leaky_relu
    h1 = jnp.dot(state.astype(wdt), w1_ref[...],
                 preferred_element_type=jnp.float32) + b1
    h1 = _leaky_relu(h1)

    # fc2 on concat([h1, action]) == h1 @ W2_top + action @ W2_bottom
    h2 = (jnp.dot(h1.astype(wdt), w2s_ref[...],
                  preferred_element_type=jnp.float32)
          + jnp.dot(action.astype(wdt), w2a_ref[...],
                    preferred_element_type=jnp.float32)
          + b2)
    h2 = _leaky_relu(_batchnorm_train(h2, g2, be2))

    # fc3 + bn3 + leaky_relu
    h3 = jnp.dot(h2.astype(wdt), w3_ref[...],
                 preferred_element_type=jnp.float32) + b3
    h3 = _leaky_relu(_batchnorm_train(h3, g3, be3))

    # fc4 (K=128, N=1): keep it off the MXU — VPU multiply + XLU lane reduce.
    q = jnp.sum(h3 * w4r.astype(jnp.float32), axis=-1, keepdims=True) + b4
    q = jax.nn.sigmoid(q)

    # Lane-dense store: broadcast into the padded (batch, 128) output slab.
    out_ref[...] = jnp.broadcast_to(q, out_ref.shape)


@jax.jit
def critic_forward(state, action, params):
    """params = (w1, w2_state, w2_action, w3, vec_pack) from pack_critic_params."""
    w1, w2s, w2a, w3, vec_pack = params
    batch = state.shape[0]
    vmem = pl.BlockSpec(memory_space=pltpu.MemorySpace.VMEM)
    out_pad = pl.pallas_call(
        critic_kernel,
        out_shape=jax.ShapeDtypeStruct((batch, LANE), jnp.float32),
        in_specs=[vmem] * 7,
        out_specs=vmem,
        compiler_params=pltpu.CompilerParams(vmem_limit_bytes=4 * 1024 * 1024),
    )(state, action, w1, w2s, w2a, w3, vec_pack)
    # Slice the lane-dense padded output down to the real (batch, 1) Q-value.
    return out_pad[:, :1]


def init_critic_params(key, state_size, action_size, n_agents,
                       fc1_units=256, fc2_units=128, fc3_units=128):
    """Deterministic init mirroring Critic.__init__ / reset_parameters."""
    s_in = state_size * n_agents
    a_in = action_size * n_agents
    keys = jax.random.split(key, 8)

    def uniform(k, shape, lim):
        return jax.random.uniform(k, shape, jnp.float32, -lim, lim)

    # reset_parameters uses lim = 1/sqrt(weight.size(0)) = 1/sqrt(out_features)
    w1 = uniform(keys[0], (s_in, fc1_units), 1.0 / (fc1_units ** 0.5))
    b1 = uniform(keys[1], (1, fc1_units), 1.0 / (s_in ** 0.5))

    w2 = uniform(keys[2], (fc1_units + a_in, fc2_units), 1.0 / (fc2_units ** 0.5))
    b2 = uniform(keys[3], (1, fc2_units), 1.0 / ((fc1_units + a_in) ** 0.5))

    w3 = uniform(keys[4], (fc2_units, fc3_units), 1.0 / (fc3_units ** 0.5))
    b3 = uniform(keys[5], (1, fc3_units), 1.0 / (fc2_units ** 0.5))

    w4 = uniform(keys[6], (fc3_units, 1), 3e-3)
    b4 = uniform(keys[7], (1, 1), 1.0 / (fc3_units ** 0.5))

    g2 = jnp.ones((1, fc2_units), jnp.float32)
    be2 = jnp.zeros((1, fc2_units), jnp.float32)
    g3 = jnp.ones((1, fc3_units), jnp.float32)
    be3 = jnp.zeros((1, fc3_units), jnp.float32)

    return dict(w1=w1, b1=b1, w2=w2, b2=b2, g2=g2, be2=be2,
                w3=w3, b3=b3, g3=g3, be3=be3, w4=w4, b4=b4,
                fc1_units=fc1_units, fc2_units=fc2_units, fc3_units=fc3_units)


def pack_critic_params(raw, weight_dtype=jnp.float32):
    """Pack parameters for the kernel: 4 weight matrices + one (8, 256) vector pack.

    weight_dtype=jnp.bfloat16 halves weight DMA bytes and is MXU-native on
    v6e/v7x (keep f32 on v5e / when exact f32 semantics are required).
    """
    fc1, fc2, fc3 = raw["fc1_units"], raw["fc2_units"], raw["fc3_units"]
    # TODO(synk): packing layout assumes the module defaults 256/128/128;
    # generalize slot offsets if other widths are used.
    assert fc1 == 2 * LANE and fc2 == LANE and fc3 == LANE

    w2s = raw["w2"][:fc1, :]    # rows multiplying h1
    w2a = raw["w2"][fc1:, :]    # rows multiplying action

    vec = jnp.zeros((8, fc1), jnp.float32)
    vec = vec.at[0, :].set(raw["b1"][0])
    vec = vec.at[1, :LANE].set(raw["b2"][0]).at[1, LANE:2 * LANE].set(raw["b3"][0])
    vec = vec.at[2, :LANE].set(raw["g2"][0]).at[2, LANE:2 * LANE].set(raw["g3"][0])
    vec = vec.at[3, :LANE].set(raw["be2"][0]).at[3, LANE:2 * LANE].set(raw["be3"][0])
    vec = vec.at[4, :LANE].set(raw["w4"][:, 0]).at[4, LANE].set(raw["b4"][0, 0])

    return (raw["w1"].astype(weight_dtype),
            w2s.astype(weight_dtype),
            w2a.astype(weight_dtype),
            raw["w3"].astype(weight_dtype),
            vec)


def reference_forward(state, action, raw):
    """Pure-JAX reference (uses the real concat) for correctness check."""
    h1 = _leaky_relu(state @ raw["w1"] + raw["b1"])
    h2 = jnp.concatenate([h1, action], axis=1) @ raw["w2"] + raw["b2"]
    h2 = _leaky_relu(_batchnorm_train(h2, raw["g2"], raw["be2"]))
    h3 = h2 @ raw["w3"] + raw["b3"]
    h3 = _leaky_relu(_batchnorm_train(h3, raw["g3"], raw["be3"]))
    return jax.nn.sigmoid(h3 @ raw["w4"] + raw["b4"])


if __name__ == "__main__":
    # batch=128 so the MXU M dimension is fully populated (per perf review);
    # total data is still tiny (<100 KiB). state_size=8, action_size=4, 2 agents.
    batch, state_size, action_size, n_agents = 128, 8, 4, 2

    key = jax.random.PRNGKey(0)
    k_params, k_state, k_action = jax.random.split(key, 3)

    raw = init_critic_params(k_params, state_size, action_size, n_agents)
    packed = pack_critic_params(raw)  # f32 weights (exact PyTorch semantics)

    state = jax.random.normal(k_state, (batch, state_size * n_agents), jnp.float32)
    action = jax.random.normal(k_action, (batch, action_size * n_agents), jnp.float32)

    out = jax.block_until_ready(critic_forward(state, action, packed))
    ref = reference_forward(state, action, raw)

    assert out.shape == (batch, 1)
    assert jnp.allclose(out, ref, atol=1e-4, rtol=1e-4), "mismatch vs reference"

    print("KERNEL_OK")
</pallas_src>

<mosaic_0001>
module attributes {stable_mosaic.version = 11 : i64} {
  func.func @critic_kernel(%arg0: memref<128x16xf32, #tpu.memory_space<vmem>>, %arg1: memref<128x8xf32, #tpu.memory_space<vmem>>, %arg2: memref<16x256xf32, #tpu.memory_space<vmem>>, %arg3: memref<256x128xf32, #tpu.memory_space<vmem>>, %arg4: memref<8x128xf32, #tpu.memory_space<vmem>>, %arg5: memref<128x128xf32, #tpu.memory_space<vmem>>, %arg6: memref<8x256xf32, #tpu.memory_space<vmem>>, %arg7: memref<128x128xf32, #tpu.memory_space<vmem>>) attributes {dimension_semantics = [], scalar_prefetch = 0 : i64, scratch_operands = 0 : i64, tpu.core_type = #tpu.core_type<tc>} {
    %c0 = arith.constant 0 : index
    %c0_0 = arith.constant 0 : index
    %0 = vector.load %arg0[%c0, %c0_0] : memref<128x16xf32, #tpu.memory_space<vmem>>, vector<128x16xf32>
    %c0_1 = arith.constant 0 : index
    %c0_2 = arith.constant 0 : index
    %1 = vector.load %arg1[%c0_1, %c0_2] : memref<128x8xf32, #tpu.memory_space<vmem>>, vector<128x8xf32>
    %c0_3 = arith.constant 0 : index
    %c0_4 = arith.constant 0 : index
    %2 = vector.load %arg6[%c0_3, %c0_4] : memref<8x256xf32, #tpu.memory_space<vmem>>, vector<1x256xf32>
    %c1 = arith.constant 1 : index
    %c0_5 = arith.constant 0 : index
    %3 = vector.load %arg6[%c1, %c0_5] : memref<8x256xf32, #tpu.memory_space<vmem>>, vector<1x128xf32>
    %c1_6 = arith.constant 1 : index
    %c128 = arith.constant 128 : index
    %4 = vector.load %arg6[%c1_6, %c128] : memref<8x256xf32, #tpu.memory_space<vmem>>, vector<1x128xf32>
    %c2 = arith.constant 2 : index
    %c0_7 = arith.constant 0 : index
    %5 = vector.load %arg6[%c2, %c0_7] : memref<8x256xf32, #tpu.memory_space<vmem>>, vector<1x128xf32>
    %c2_8 = arith.constant 2 : index
    %c128_9 = arith.constant 128 : index
    %6 = vector.load %arg6[%c2_8, %c128_9] : memref<8x256xf32, #tpu.memory_space<vmem>>, vector<1x128xf32>
    %c3 = arith.constant 3 : index
    %c0_10 = arith.constant 0 : index
    %7 = vector.load %arg6[%c3, %c0_10] : memref<8x256xf32, #tpu.memory_space<vmem>>, vector<1x128xf32>
    %c3_11 = arith.constant 3 : index
    %c128_12 = arith.constant 128 : index
    %8 = vector.load %arg6[%c3_11, %c128_12] : memref<8x256xf32, #tpu.memory_space<vmem>>, vector<1x128xf32>
    %c4 = arith.constant 4 : index
    %c0_13 = arith.constant 0 : index
    %9 = vector.load %arg6[%c4, %c0_13] : memref<8x256xf32, #tpu.memory_space<vmem>>, vector<1x128xf32>
    %c4_14 = arith.constant 4 : index
    %c128_15 = arith.constant 128 : index
    %10 = vector.load %arg6[%c4_14, %c128_15] : memref<8x256xf32, #tpu.memory_space<vmem>>, vector<1x1xf32>
    %c0_16 = arith.constant 0 : index
    %c0_17 = arith.constant 0 : index
    %11 = vector.load %arg2[%c0_16, %c0_17] : memref<16x256xf32, #tpu.memory_space<vmem>>, vector<16x256xf32>
    %cst = arith.constant dense<0.000000e+00> : vector<128x256xf32>
    %12 = tpu.matmul %0, %11, %cst {dimension_numbers = #tpu.dot_dimension_numbers<[1], [0], [0], [1], [0, 0, 1, 1], [], []>} : vector<128x16xf32>, vector<16x256xf32>, vector<128x256xf32> -> vector<128x256xf32>
    %13 = vector.broadcast %2 : vector<1x256xf32> to vector<128x256xf32>
    %14 = arith.addf %12, %13 : vector<128x256xf32>
    %cst_18 = arith.constant 0.000000e+00 : f32
    %15 = vector.broadcast %cst_18 : f32 to vector<128x256xf32>
    %16 = arith.cmpf ogt, %14, %15 : vector<128x256xf32>
    %cst_19 = arith.constant 0.00999999977 : f32
    %17 = vector.broadcast %cst_19 : f32 to vector<128x256xf32>
    %18 = arith.mulf %17, %14 : vector<128x256xf32>
    %19 = arith.select %16, %14, %18 : vector<128x256xi1>, vector<128x256xf32>
    %c0_20 = arith.constant 0 : index
    %c0_21 = arith.constant 0 : index
    %20 = vector.load %arg3[%c0_20, %c0_21] : memref<256x128xf32, #tpu.memory_space<vmem>>, vector<256x128xf32>
    %cst_22 = arith.constant dense<0.000000e+00> : vector<128x128xf32>
    %21 = tpu.matmul %19, %20, %cst_22 {dimension_numbers = #tpu.dot_dimension_numbers<[1], [0], [0], [1], [0, 0, 1, 1], [], []>} : vector<128x256xf32>, vector<256x128xf32>, vector<128x128xf32> -> vector<128x128xf32>
    %c0_23 = arith.constant 0 : index
    %c0_24 = arith.constant 0 : index
    %22 = vector.load %arg4[%c0_23, %c0_24] : memref<8x128xf32, #tpu.memory_space<vmem>>, vector<8x128xf32>
    %cst_25 = arith.constant dense<0.000000e+00> : vector<128x128xf32>
    %23 = tpu.matmul %1, %22, %cst_25 {dimension_numbers = #tpu.dot_dimension_numbers<[1], [0], [0], [1], [0, 0, 1, 1], [], []>} : vector<128x8xf32>, vector<8x128xf32>, vector<128x128xf32> -> vector<128x128xf32>
    %24 = arith.addf %21, %23 : vector<128x128xf32>
    %25 = vector.broadcast %3 : vector<1x128xf32> to vector<128x128xf32>
    %26 = arith.addf %24, %25 : vector<128x128xf32>
    %cst_26 = arith.constant dense<0.000000e+00> : vector<128xf32>
    %27 = vector.multi_reduction <add>, %26, %cst_26 [0] : vector<128x128xf32> to vector<128xf32>
    %28 = vector.shape_cast %27 : vector<128xf32> to vector<1x128xf32>
    %cst_27 = arith.constant 1.280000e+02 : f32
    %29 = vector.broadcast %cst_27 : f32 to vector<1x128xf32>
    %30 = arith.divf %28, %29 : vector<1x128xf32>
    %31 = vector.broadcast %30 : vector<1x128xf32> to vector<128x128xf32>
    %32 = arith.subf %26, %31 : vector<128x128xf32>
    %33 = arith.mulf %32, %32 : vector<128x128xf32>
    %cst_28 = arith.constant dense<0.000000e+00> : vector<128xf32>
    %34 = vector.multi_reduction <add>, %33, %cst_28 [0] : vector<128x128xf32> to vector<128xf32>
    %35 = vector.shape_cast %34 : vector<128xf32> to vector<1x128xf32>
    %cst_29 = arith.constant 1.280000e+02 : f32
    %36 = vector.broadcast %cst_29 : f32 to vector<1x128xf32>
    %37 = arith.divf %35, %36 : vector<1x128xf32>
    %cst_30 = arith.constant 9.99999974E-6 : f32
    %38 = vector.broadcast %cst_30 : f32 to vector<1x128xf32>
    %39 = arith.addf %37, %38 : vector<1x128xf32>
    %40 = math.rsqrt %39 : vector<1x128xf32>
    %41 = arith.mulf %5, %40 : vector<1x128xf32>
    %42 = arith.mulf %30, %41 : vector<1x128xf32>
    %43 = arith.subf %7, %42 : vector<1x128xf32>
    %44 = vector.broadcast %41 : vector<1x128xf32> to vector<128x128xf32>
    %45 = arith.mulf %26, %44 : vector<128x128xf32>
    %46 = vector.broadcast %43 : vector<1x128xf32> to vector<128x128xf32>
    %47 = arith.addf %45, %46 : vector<128x128xf32>
    %cst_31 = arith.constant 0.000000e+00 : f32
    %48 = vector.broadcast %cst_31 : f32 to vector<128x128xf32>
    %49 = arith.cmpf ogt, %47, %48 : vector<128x128xf32>
    %cst_32 = arith.constant 0.00999999977 : f32
    %50 = vector.broadcast %cst_32 : f32 to vector<128x128xf32>
    %51 = arith.mulf %50, %47 : vector<128x128xf32>
    %52 = arith.select %49, %47, %51 : vector<128x128xi1>, vector<128x128xf32>
    %c0_33 = arith.constant 0 : index
    %c0_34 = arith.constant 0 : index
    %53 = vector.load %arg5[%c0_33, %c0_34] : memref<128x128xf32, #tpu.memory_space<vmem>>, vector<128x128xf32>
    %cst_35 = arith.constant dense<0.000000e+00> : vector<128x128xf32>
    %54 = tpu.matmul %52, %53, %cst_35 {dimension_numbers = #tpu.dot_dimension_numbers<[1], [0], [0], [1], [0, 0, 1, 1], [], []>} : vector<128x128xf32>, vector<128x128xf32>, vector<128x128xf32> -> vector<128x128xf32>
    %55 = vector.broadcast %4 : vector<1x128xf32> to vector<128x128xf32>
    %56 = arith.addf %54, %55 : vector<128x128xf32>
    %cst_36 = arith.constant dense<0.000000e+00> : vector<128xf32>
    %57 = vector.multi_reduction <add>, %56, %cst_36 [0] : vector<128x128xf32> to vector<128xf32>
    %58 = vector.shape_cast %57 : vector<128xf32> to vector<1x128xf32>
    %cst_37 = arith.constant 1.280000e+02 : f32
    %59 = vector.broadcast %cst_37 : f32 to vector<1x128xf32>
    %60 = arith.divf %58, %59 : vector<1x128xf32>
    %61 = vector.broadcast %60 : vector<1x128xf32> to vector<128x128xf32>
    %62 = arith.subf %56, %61 : vector<128x128xf32>
    %63 = arith.mulf %62, %62 : vector<128x128xf32>
    %cst_38 = arith.constant dense<0.000000e+00> : vector<128xf32>
    %64 = vector.multi_reduction <add>, %63, %cst_38 [0] : vector<128x128xf32> to vector<128xf32>
    %65 = vector.shape_cast %64 : vector<128xf32> to vector<1x128xf32>
    %cst_39 = arith.constant 1.280000e+02 : f32
    %66 = vector.broadcast %cst_39 : f32 to vector<1x128xf32>
    %67 = arith.divf %65, %66 : vector<1x128xf32>
    %cst_40 = arith.constant 9.99999974E-6 : f32
    %68 = vector.broadcast %cst_40 : f32 to vector<1x128xf32>
    %69 = arith.addf %67, %68 : vector<1x128xf32>
    %70 = math.rsqrt %69 : vector<1x128xf32>
    %71 = arith.mulf %6, %70 : vector<1x128xf32>
    %72 = arith.mulf %60, %71 : vector<1x128xf32>
    %73 = arith.subf %8, %72 : vector<1x128xf32>
    %74 = vector.broadcast %71 : vector<1x128xf32> to vector<128x128xf32>
    %75 = arith.mulf %56, %74 : vector<128x128xf32>
    %76 = vector.broadcast %73 : vector<1x128xf32> to vector<128x128xf32>
    %77 = arith.addf %75, %76 : vector<128x128xf32>
    %cst_41 = arith.constant 0.000000e+00 : f32
    %78 = vector.broadcast %cst_41 : f32 to vector<128x128xf32>
    %79 = arith.cmpf ogt, %77, %78 : vector<128x128xf32>
    %cst_42 = arith.constant 0.00999999977 : f32
    %80 = vector.broadcast %cst_42 : f32 to vector<128x128xf32>
    %81 = arith.mulf %80, %77 : vector<128x128xf32>
    %82 = arith.select %79, %77, %81 : vector<128x128xi1>, vector<128x128xf32>
    %83 = vector.broadcast %9 : vector<1x128xf32> to vector<128x128xf32>
    %84 = arith.mulf %82, %83 : vector<128x128xf32>
    %cst_43 = arith.constant dense<0.000000e+00> : vector<128xf32>
    %85 = vector.multi_reduction <add>, %84, %cst_43 [1] : vector<128x128xf32> to vector<128xf32>
    %86 = vector.shape_cast %85 : vector<128xf32> to vector<128x1xf32>
    %87 = vector.broadcast %10 : vector<1x1xf32> to vector<128x1xf32>
    %88 = arith.addf %86, %87 : vector<128x1xf32>
    %89 = arith.negf %88 : vector<128x1xf32>
    %90 = math.exp %89 : vector<128x1xf32>
    %cst_44 = arith.constant 1.000000e+00 : f32
    %91 = vector.broadcast %cst_44 : f32 to vector<128x1xf32>
    %92 = arith.addf %91, %90 : vector<128x1xf32>
    %93 = arith.divf %91, %92 : vector<128x1xf32>
    %94 = vector.shape_cast %93 : vector<128x1xf32> to vector<128x1xf32>
    %95 = vector.broadcast %94 : vector<128x1xf32> to vector<128x128xf32>
    %c0_45 = arith.constant 0 : index
    %c0_46 = arith.constant 0 : index
    %96 = vector.load %arg7[%c0_45, %c0_46] : memref<128x128xf32, #tpu.memory_space<vmem>>, vector<128x128xf32>
    tpu.vector_store %arg7[%c0_45, %c0_46], %95 {strides = array<i32>} : memref<128x128xf32, #tpu.memory_space<vmem>>, vector<128x128xf32>,
    return
  }
}

</mosaic_0001>

<llo_original>
// kernel: critic_forward.1
$region0: #{critic_forward.1}
  #allocation0 [shape = 'u32[]', space=smem, size = 0x4, offset = 0x4, fixed_abs, tag = 'smem constant byte address 0x4 - core index']
  #allocation1 [shape = 'u32[144,128]{1,0:T(1,128)}', space=vmem, size = 0x12000, scoped, tag = 'internal scratch']
  %s0 = inlined_call_operand.vmem [shape: f32[128,16], index: 0, kind: input, shape index: {}]
  %s1 = inlined_call_operand.vmem [shape: f32[128,8], index: 1, kind: input, shape index: {}]
  %s2 = inlined_call_operand.vmem [shape: f32[16,256], index: 2, kind: input, shape index: {}]
  %s3 = inlined_call_operand.vmem [shape: f32[256,128], index: 3, kind: input, shape index: {}]
  %s4 = inlined_call_operand.hbm [shape: f32[8,128], index: 4, kind: input, shape index: {}]
  %s5 = inlined_call_operand.hbm [shape: f32[128,128], index: 5, kind: input, shape index: {}]
  %s6 = inlined_call_operand.hbm [shape: f32[8,256], index: 6, kind: input, shape index: {}]
  %s7 = inlined_call_operand.vmem [shape: f32[128,128], index: 7, kind: output, shape index: {}]
  %s8 = sld [smem:[#allocation0]]
  $region50: #{critic_forward.1} parent=0
    _
  %s10 = ssub.s32 1, %s8
  %s11 = scalar_select 0, %s10, %s8
  $region1: #{critic_forward.1} parent=0
    #allocation2 [shape = 'u8[4096]{0}', space=vmem, size = 0x1000, scoped, tag = 'input window, operand 4, single buffered']
    #allocation3 [shape = 's32[1]{0}', space=sflag, size = 0x4, scoped, tag = 'scoped memory for critic_forward.1']
    #allocation4 [shape = 'u8[65536]{0}', space=vmem, size = 0x10000, scoped, tag = 'input window, operand 5, single buffered']
    #allocation5 [shape = 's32[1]{0}', space=sflag, size = 0x4, scoped, tag = 'scoped memory for critic_forward.1']
    #allocation6 [shape = 'u8[8192]{0}', space=vmem, size = 0x2000, scoped, tag = 'input window, operand 6, single buffered']
    %12 = vsyncpa [#allocation3], 0
    %13 = vsyncpa [#allocation5], 0
    // Predicated region
    $region2: #{critic_forward.1} parent=1 // pred_check
      _
    $region3: #{critic_forward.1} parent=1 // pred_check_branch
      %15 = sbr.rel (0) target = $region5
    $region4: #{critic_forward.1} parent=1 // pred_region
      _
    $region5: #{critic_forward.1} parent=1 // pred_fallthru
      _
    // Predicated region
    $region6: #{critic_forward.1} parent=1 // pred_check
      _
    $region7: #{critic_forward.1} parent=1 // pred_check_branch
      %17 = sbr.rel (0) target = $region9
    $region8: #{critic_forward.1} parent=1 // pred_region
      _
    $region9: #{critic_forward.1} parent=1 // pred_fallthru
      _
    // Predicated region
    $region10: #{critic_forward.1} parent=1 // pred_check
      _
    $region11: #{critic_forward.1} parent=1 // pred_check_branch
      %19 = sbr.rel (0) target = $region13
    $region12: #{critic_forward.1} parent=1 // pred_region
      _
    $region13: #{critic_forward.1} parent=1 // pred_fallthru
      _
    // Predicated region
    $region14: #{critic_forward.1} parent=1 // pred_check
      _
    $region15: #{critic_forward.1} parent=1 // pred_check_branch
      %21 = sbr.rel (0) target = $region17
    $region16: #{critic_forward.1} parent=1 // pred_region
      _
    $region17: #{critic_forward.1} parent=1 // pred_fallthru
      _
    // Predicated region
    $region18: #{critic_forward.1} parent=1 // pred_check
      _
    $region19: #{critic_forward.1} parent=1 // pred_check_branch
      %23 = sbr.rel (0) target = $region21
    $region20: #{critic_forward.1} parent=1 // pred_region
      %s25 = ssub.s32 128, 128
      %26 = vsyncadd [#allocation3], %s25
      %s28 = sshll.u32 [#allocation2], 4
      %s29 = int_to_ptr.vmem [resolvable:$true] %s28
      %31 = dma.hbm_to_vmem [thread:$0]  %s4, 128, %s29, [#allocation3]
    $region21: #{critic_forward.1} parent=1 // pred_fallthru
      _
    // Predicated region
    $region22: #{critic_forward.1} parent=1 // pred_check
      _
    $region23: #{critic_forward.1} parent=1 // pred_check_branch
      %33 = sbr.rel (0) target = $region25
    $region24: #{critic_forward.1} parent=1 // pred_region
      %s35 = ssub.s32 2048, 2048
      %36 = vsyncadd [#allocation5], %s35
      %s37 = sshll.u32 [#allocation4], 4
      %s38 = int_to_ptr.vmem [resolvable:$true] %s37
      %43 = dma.hbm_to_vmem [thread:$0]  %s5, 2048, %s38, [#allocation5], 128, 128, 8
    $region25: #{critic_forward.1} parent=1 // pred_fallthru
      _
    // Predicated region
    $region26: #{critic_forward.1} parent=1 // pred_check
      _
    $region27: #{critic_forward.1} parent=1 // pred_check_branch
      %45 = sbr.rel (0) target = $region29
    $region28: #{critic_forward.1} parent=1 // pred_region
      %s47 = ssub.s32 256, 256
      %48 = vsyncadd [#allocation5], %s47
      %s50 = sshll.u32 [#allocation6], 4
      %s51 = int_to_ptr.vmem [resolvable:$true] %s50
      %53 = dma.hbm_to_vmem [thread:$0]  %s6, 256, %s51, [#allocation5]
    $region29: #{critic_forward.1} parent=1 // pred_fallthru
      _
    // Predicated region
    $region30: #{critic_forward.1} parent=1 // pred_check
      _
    $region31: #{critic_forward.1} parent=1 // pred_check_branch
      %55 = sbr.rel (0) target = $region33
    $region32: #{critic_forward.1} parent=1 // pred_region
      %56 = dma.done [#allocation3], 128
    $region33: #{critic_forward.1} parent=1 // pred_fallthru
      _
    // Predicated region
    $region34: #{critic_forward.1} parent=1 // pred_check
      _
    $region35: #{critic_forward.1} parent=1 // pred_check_branch
      %58 = sbr.rel (0) target = $region37
    $region36: #{critic_forward.1} parent=1 // pred_region
      %59 = dma.done [#allocation5], 2048
    $region37: #{critic_forward.1} parent=1 // pred_fallthru
      _
    // Predicated region
    $region38: #{critic_forward.1} parent=1 // pred_check
      _
    $region39: #{critic_forward.1} parent=1 // pred_check_branch
      %61 = sbr.rel (0) target = $region41
    $region40: #{critic_forward.1} parent=1 // pred_region
      %62 = dma.done [#allocation5], 256
    $region41: #{critic_forward.1} parent=1 // pred_fallthru
      _
    %v63 = vld [vmem:[%s0] sm:$0xff]
    %v64 = vld [vmem:[%s0 + $0x8] sm:$0xff]
    %v65 = vld [vmem:[%s0 + $0x10] sm:$0xff]
    %v66 = vld [vmem:[%s0 + $0x18] sm:$0xff]
    %v67 = vld [vmem:[%s0 + $0x20] sm:$0xff]
    %v68 = vld [vmem:[%s0 + $0x28] sm:$0xff]
    %v69 = vld [vmem:[%s0 + $0x30] sm:$0xff]
    %v70 = vld [vmem:[%s0 + $0x38] sm:$0xff]
    %v71 = vld [vmem:[%s0 + $0x40] sm:$0xff]
    %v72 = vld [vmem:[%s0 + $0x48] sm:$0xff]
    %v73 = vld [vmem:[%s0 + $0x50] sm:$0xff]
    %v74 = vld [vmem:[%s0 + $0x58] sm:$0xff]
    %v75 = vld [vmem:[%s0 + $0x60] sm:$0xff]
    %v76 = vld [vmem:[%s0 + $0x68] sm:$0xff]
    %v77 = vld [vmem:[%s0 + $0x70] sm:$0xff]
    %v78 = vld [vmem:[%s0 + $0x78] sm:$0xff]
    %v79 = vld [vmem:[%s1] sm:$0xff]
    %v80 = vld [vmem:[%s1 + $0x8] sm:$0xff]
    %v81 = vld [vmem:[%s1 + $0x10] sm:$0xff]
    %v82 = vld [vmem:[%s1 + $0x18] sm:$0xff]
    %v83 = vld [vmem:[%s1 + $0x20] sm:$0xff]
    %v84 = vld [vmem:[%s1 + $0x28] sm:$0xff]
    %v85 = vld [vmem:[%s1 + $0x30] sm:$0xff]
    %v86 = vld [vmem:[%s1 + $0x38] sm:$0xff]
    %v87 = vld [vmem:[%s1 + $0x40] sm:$0xff]
    %v88 = vld [vmem:[%s1 + $0x48] sm:$0xff]
    %v89 = vld [vmem:[%s1 + $0x50] sm:$0xff]
    %v90 = vld [vmem:[%s1 + $0x58] sm:$0xff]
    %v91 = vld [vmem:[%s1 + $0x60] sm:$0xff]
    %v92 = vld [vmem:[%s1 + $0x68] sm:$0xff]
    %v93 = vld [vmem:[%s1 + $0x70] sm:$0xff]
    %v94 = vld [vmem:[%s1 + $0x78] sm:$0xff]
    %v95 = vld [vmem:[#allocation6] ss:$8 sm:$0x3]
    %v96 = vld [vmem:[#allocation6 + $0x1] ss:$0 sm:$0xff]
    %v97 = vld [vmem:[#allocation6 + $0x9] ss:$0 sm:$0xff]
    %v98 = vld [vmem:[#allocation6 + $0x2] ss:$0 sm:$0xff]
    %v99 = vld [vmem:[#allocation6 + $0xa] ss:$0 sm:$0xff]
    %v100 = vld [vmem:[#allocation6 + $0x3] ss:$0 sm:$0xff]
    %v101 = vld [vmem:[#allocation6 + $0xb] ss:$0 sm:$0xff]
    %v102 = vld [vmem:[#allocation6 + $0x4] ss:$0 sm:$0xff]
    %v103 = vld [vmem:[#allocation6 + $0xc] ss:$0 sm:$0xff]
    %v104 = vld [vmem:[%s2] sm:$0xff]
    %v105 = vld [vmem:[%s2 + $0x8] sm:$0xff]
    %v106 = vld [vmem:[%s2 + $0x10] sm:$0xff]
    %v107 = vld [vmem:[%s2 + $0x18] sm:$0xff]
    %v109 = vlaneseq
    %v110 = vshrl.u32 %v109, 7
    %v111 = vsub.s32 0, %v110
    %v112 = vrot.slane %v95, %v111
    %v113 = vlaneseq
    %v114 = vshrl.u32 %v113, 7
    %v115 = vsub.s32 1, %v114
    %v116 = vrot.slane %v95, %v115
    %vm119 = vcmask 130048
    %v121 = vsel %vm119, %v63, 0
    %v124 = vsel %vm119, %v64, 0
    %v127 = vsel %vm119, %v65, 0
    %v130 = vsel %vm119, %v66, 0
    %v133 = vsel %vm119, %v67, 0
    %v136 = vsel %vm119, %v68, 0
    %v139 = vsel %vm119, %v69, 0
    %v142 = vsel %vm119, %v70, 0
    %v145 = vsel %vm119, %v71, 0
    %v148 = vsel %vm119, %v72, 0
    %v151 = vsel %vm119, %v73, 0
    %v154 = vsel %vm119, %v74, 0
    %v157 = vsel %vm119, %v75, 0
    %v160 = vsel %vm119, %v76, 0
    %v163 = vsel %vm119, %v77, 0
    %v166 = vsel %vm119, %v78, 0
    %168 = vmatprep.subr.mxu0 %v105
    %169 = vmatpush1.msra.mxu0 %v104
    %170 = vmatprep.subr.mxu0 %v107
    %171 = vmatpush1.msra.mxu0 %v106
    %172 = vmatprep.subr.mxu0 0.0
    %173 = vmatpush1.msra.mxu0 0.0
    %174 = vmatprep.subr.mxu0 0.0
    %175 = vmatpush1.msra.mxu0 0.0
    %176 = vmatprep.subr.mxu0 0.0
    %177 = vmatpush1.msra.mxu0 0.0
    %178 = vmatprep.subr.mxu0 0.0
    %179 = vmatpush1.msra.mxu0 0.0
    %180 = vmatprep.subr.mxu0 0.0
    %181 = vmatpush1.msra.mxu0 0.0
    %182 = vmatprep.subr.mxu0 0.0
    %183 = vmatpush1.msra.mxu0 0.0
    %184 = vmatprep.subr.mxu0 0.0
    %185 = vmatpush1.msra.mxu0 0.0
    %186 = vmatprep.subr.mxu0 0.0
    %187 = vmatpush1.msra.mxu0 0.0
    %188 = vmatprep.subr.mxu0 0.0
    %189 = vmatpush1.msra.mxu0 0.0
    %190 = vmatprep.subr.mxu0 0.0
    %191 = vmatpush1.msra.mxu0 0.0
    %192 = vmatprep.subr.mxu0 0.0
    %193 = vmatpush1.msra.mxu0 0.0
    %194 = vmatprep.subr.mxu0 0.0
    %195 = vmatpush1.msra.mxu0 0.0
    %196 = vmatprep.subr.mxu0 0.0
    %197 = vmatpush1.msra.mxu0 0.0
    %198 = vmatprep.subr.mxu0 0.0
    %199 = vmatpush1.msra.mxu0 0.0
    %200 = vmatprep.subr.mxu0 0.0
    %201 = vmatpush1.msra.mxu0 0.0
    %202 = vmatprep.subr.mxu0 0.0
    %203 = vmatpush1.msra.mxu0 0.0
    %204 = vmatprep.subr.mxu0 0.0
    %205 = vmatpush1.msra.mxu0 0.0
    %206 = vmatprep.subr.mxu0 0.0
    %207 = vmatpush1.msra.mxu0 0.0
    %208 = vmatprep.subr.mxu0 0.0
    %209 = vmatpush1.msra.mxu0 0.0
    %210 = vmatprep.subr.mxu0 0.0
    %211 = vmatpush1.msra.mxu0 0.0
    %212 = vmatprep.subr.mxu0 0.0
    %213 = vmatpush1.msra.mxu0 0.0
    %214 = vmatprep.subr.mxu0 0.0
    %215 = vmatpush1.msra.mxu0 0.0
    %216 = vmatprep.subr.mxu0 0.0
    %217 = vmatpush1.msra.mxu0 0.0
    %218 = vmatprep.subr.mxu0 0.0
    %219 = vmatpush1.msra.mxu0 0.0
    %220 = vmatprep.subr.mxu0 0.0
    %221 = vmatpush1.msra.mxu0 0.0
    %222 = vmatprep.subr.mxu0 0.0
    %223 = vmatpush1.msra.mxu0 0.0
    %224 = vmatprep.subr.mxu0 0.0
    %225 = vmatpush1.msra.mxu0 0.0
    %226 = vmatprep.subr.mxu0 0.0
    %227 = vmatpush1.msra.mxu0 0.0
    %228 = vmatprep.subr.mxu0 0.0
    %229 = vmatpush1.msra.mxu0 0.0
    %230 = vmatprep.subr.mxu0 0.0
    %231 = vmatpush1.msra.mxu0 0.0
    %232 = vmatprep.mubr.f32.mxu0 0.0
    %233 = vmatmul.mubr.f32.gmra.mrb[0].mxu0 %v121
    %v234 = vpop.f32.mrb[0].mxu0
    %v235 = vadd.f32 %v112, %v234
    %v236 = vpop.f32.mrb[0].mxu0
    %v237 = vadd.f32 %v116, %v236
    %238 = vmatprep.mubr.f32.mxu0 0.0
    %239 = vmatmul.mubr.f32.gmra.mrb[0].mxu0 %v124
    %v240 = vpop.f32.mrb[0].mxu0
    %v241 = vadd.f32 %v112, %v240
    %v242 = vpop.f32.mrb[0].mxu0
    %v243 = vadd.f32 %v116, %v242
    %244 = vmatprep.mubr.f32.mxu0 0.0
    %245 = vmatmul.mubr.f32.gmra.mrb[0].mxu0 %v127
    %v246 = vpop.f32.mrb[0].mxu0
    %v247 = vadd.f32 %v112, %v246
    %v248 = vpop.f32.mrb[0].mxu0
    %v249 = vadd.f32 %v116, %v248
    %250 = vmatprep.mubr.f32.mxu0 0.0
    %251 = vmatmul.mubr.f32.gmra.mrb[0].mxu0 %v130
    %v252 = vpop.f32.mrb[0].mxu0
    %v253 = vadd.f32 %v112, %v252
    %v254 = vpop.f32.mrb[0].mxu0
    %v255 = vadd.f32 %v116, %v254
    %256 = vmatprep.mubr.f32.mxu0 0.0
    %257 = vmatmul.mubr.f32.gmra.mrb[0].mxu0 %v133
    %v258 = vpop.f32.mrb[0].mxu0
    %v259 = vadd.f32 %v112, %v258
    %v260 = vpop.f32.mrb[0].mxu0
    %v261 = vadd.f32 %v116, %v260
    %262 = vmatprep.mubr.f32.mxu0 0.0
    %263 = vmatmul.mubr.f32.gmra.mrb[0].mxu0 %v136
    %v264 = vpop.f32.mrb[0].mxu0
    %v265 = vadd.f32 %v112, %v264
    %v266 = vpop.f32.mrb[0].mxu0
    %v267 = vadd.f32 %v116, %v266
    %268 = vmatprep.mubr.f32.mxu0 0.0
    %269 = vmatmul.mubr.f32.gmra.mrb[0].mxu0 %v139
    %v270 = vpop.f32.mrb[0].mxu0
    %v271 = vadd.f32 %v112, %v270
    %v272 = vpop.f32.mrb[0].mxu0
    %v273 = vadd.f32 %v116, %v272
    %274 = vmatprep.mubr.f32.mxu0 0.0
    %275 = vmatmul.mubr.f32.gmra.mrb[0].mxu0 %v142
    %v276 = vpop.f32.mrb[0].mxu0
    %v277 = vadd.f32 %v112, %v276
    %v278 = vpop.f32.mrb[0].mxu0
    %v279 = vadd.f32 %v116, %v278
    %280 = vmatprep.mubr.f32.mxu0 0.0
    %281 = vmatmul.mubr.f32.gmra.mrb[0].mxu0 %v145
    %v282 = vpop.f32.mrb[0].mxu0
    %v283 = vadd.f32 %v112, %v282
    %v284 = vpop.f32.mrb[0].mxu0
    %v285 = vadd.f32 %v116, %v284
    %286 = vmatprep.mubr.f32.mxu0 0.0
    %287 = vmatmul.mubr.f32.gmra.mrb[0].mxu0 %v148
    %v288 = vpop.f32.mrb[0].mxu0
    %v289 = vadd.f32 %v112, %v288
    %v290 = vpop.f32.mrb[0].mxu0
    %v291 = vadd.f32 %v116, %v290
    %292 = vmatprep.mubr.f32.mxu0 0.0
    %293 = vmatmul.mubr.f32.gmra.mrb[0].mxu0 %v151
    %v294 = vpop.f32.mrb[0].mxu0
    %v295 = vadd.f32 %v112, %v294
    %v296 = vpop.f32.mrb[0].mxu0
    %v297 = vadd.f32 %v116, %v296
    %298 = vmatprep.mubr.f32.mxu0 0.0
    %299 = vmatmul.mubr.f32.gmra.mrb[0].mxu0 %v154
    %v300 = vpop.f32.mrb[0].mxu0
    %v301 = vadd.f32 %v112, %v300
    %v302 = vpop.f32.mrb[0].mxu0
    %v303 = vadd.f32 %v116, %v302
    %304 = vmatprep.mubr.f32.mxu0 0.0
    %305 = vmatmul.mubr.f32.gmra.mrb[0].mxu0 %v157
    %v306 = vpop.f32.mrb[0].mxu0
    %v307 = vadd.f32 %v112, %v306
    %v308 = vpop.f32.mrb[0].mxu0
    %v309 = vadd.f32 %v116, %v308
    %310 = vmatprep.mubr.f32.mxu0 0.0
    %311 = vmatmul.mubr.f32.gmra.mrb[0].mxu0 %v160
    %v312 = vpop.f32.mrb[0].mxu0
    %v313 = vadd.f32 %v112, %v312
    %v314 = vpop.f32.mrb[0].mxu0
    %v315 = vadd.f32 %v116, %v314
    %316 = vmatprep.mubr.f32.mxu0 0.0
    %317 = vmatmul.mubr.f32.gmra.mrb[0].mxu0 %v163
    %v318 = vpop.f32.mrb[0].mxu0
    %v319 = vadd.f32 %v112, %v318
    %v320 = vpop.f32.mrb[0].mxu0
    %v321 = vadd.f32 %v116, %v320
    %322 = vmatprep.mubr.f32.mxu0 0.0
    %323 = vmatmul.mubr.f32.gmra.mrb[0].mxu0 %v166
    %v324 = vpop.f32.mrb[0].mxu0
    %v325 = vadd.f32 %v112, %v324
    %v326 = vpop.f32.mrb[0].mxu0
    %v327 = vadd.f32 %v116, %v326
    %328 = vdwg.mxu0
    %vm329 = vcmp.gt.f32.partialorder %v235, 0.0
    %vm330 = vcmp.gt.f32.partialorder %v237, 0.0
    %vm331 = vcmp.gt.f32.partialorder %v241, 0.0
    %vm332 = vcmp.gt.f32.partialorder %v243, 0.0
    %vm333 = vcmp.gt.f32.partialorder %v247, 0.0
    %vm334 = vcmp.gt.f32.partialorder %v249, 0.0
    %vm335 = vcmp.gt.f32.partialorder %v253, 0.0
    %vm336 = vcmp.gt.f32.partialorder %v255, 0.0
    %vm337 = vcmp.gt.f32.partialorder %v259, 0.0
    %vm338 = vcmp.gt.f32.partialorder %v261, 0.0
    %vm339 = vcmp.gt.f32.partialorder %v265, 0.0
    %vm340 = vcmp.gt.f32.partialorder %v267, 0.0
    %vm341 = vcmp.gt.f32.partialorder %v271, 0.0
    %vm342 = vcmp.gt.f32.partialorder %v273, 0.0
    %vm343 = vcmp.gt.f32.partialorder %v277, 0.0
    %vm344 = vcmp.gt.f32.partialorder %v279, 0.0
    %vm345 = vcmp.gt.f32.partialorder %v283, 0.0
    %vm346 = vcmp.gt.f32.partialorder %v285, 0.0
    %vm347 = vcmp.gt.f32.partialorder %v289, 0.0
    %vm348 = vcmp.gt.f32.partialorder %v291, 0.0
    %vm349 = vcmp.gt.f32.partialorder %v295, 0.0
    %vm350 = vcmp.gt.f32.partialorder %v297, 0.0
    %vm351 = vcmp.gt.f32.partialorder %v301, 0.0
    %vm352 = vcmp.gt.f32.partialorder %v303, 0.0
    %vm353 = vcmp.gt.f32.partialorder %v307, 0.0
    %vm354 = vcmp.gt.f32.partialorder %v309, 0.0
    %vm355 = vcmp.gt.f32.partialorder %v313, 0.0
    %vm356 = vcmp.gt.f32.partialorder %v315, 0.0
    %vm357 = vcmp.gt.f32.partialorder %v319, 0.0
    %vm358 = vcmp.gt.f32.partialorder %v321, 0.0
    %vm359 = vcmp.gt.f32.partialorder %v325, 0.0
    %vm360 = vcmp.gt.f32.partialorder %v327, 0.0
    %v361 = vmul.f32 %v235, 0.01
    %v362 = vmul.f32 %v237, 0.01
    %v363 = vmul.f32 %v241, 0.01
    %v364 = vmul.f32 %v243, 0.01
    %v365 = vmul.f32 %v247, 0.01
    %v366 = vmul.f32 %v249, 0.01
    %v367 = vmul.f32 %v253, 0.01
    %v368 = vmul.f32 %v255, 0.01
    %v369 = vmul.f32 %v259, 0.01
    %v370 = vmul.f32 %v261, 0.01
    %v371 = vmul.f32 %v265, 0.01
    %v372 = vmul.f32 %v267, 0.01
    %v373 = vmul.f32 %v271, 0.01
    %v374 = vmul.f32 %v273, 0.01
    %v375 = vmul.f32 %v277, 0.01
    %v376 = vmul.f32 %v279, 0.01
    %v377 = vmul.f32 %v283, 0.01
    %v378 = vmul.f32 %v285, 0.01
    %v379 = vmul.f32 %v289, 0.01
    %v380 = vmul.f32 %v291, 0.01
    %v381 = vmul.f32 %v295, 0.01
    %v382 = vmul.f32 %v297, 0.01
    %v383 = vmul.f32 %v301, 0.01
    %v384 = vmul.f32 %v303, 0.01
    %v385 = vmul.f32 %v307, 0.01
    %v386 = vmul.f32 %v309, 0.01
    %v387 = vmul.f32 %v313, 0.01
    %v388 = vmul.f32 %v315, 0.01
    %v389 = vmul.f32 %v319, 0.01
    %v390 = vmul.f32 %v321, 0.01
    %v391 = vmul.f32 %v325, 0.01
    %v392 = vmul.f32 %v327, 0.01
    %v393 = vsel %vm329, %v235, %v361
    %v394 = vsel %vm330, %v237, %v362
    %v395 = vsel %vm331, %v241, %v363
    %v396 = vsel %vm332, %v243, %v364
    %v397 = vsel %vm333, %v247, %v365
    %v398 = vsel %vm334, %v249, %v366
    %v399 = vsel %vm335, %v253, %v367
    %v400 = vsel %vm336, %v255, %v368
    %v401 = vsel %vm337, %v259, %v369
    %v402 = vsel %vm338, %v261, %v370
    %v403 = vsel %vm339, %v265, %v371
    %v404 = vsel %vm340, %v267, %v372
    %v405 = vsel %vm341, %v271, %v373
    %v406 = vsel %vm342, %v273, %v374
    %v407 = vsel %vm343, %v277, %v375
    %v408 = vsel %vm344, %v279, %v376
    %v409 = vsel %vm345, %v283, %v377
    %v410 = vsel %vm346, %v285, %v378
    %v411 = vsel %vm347, %v289, %v379
    %v412 = vsel %vm348, %v291, %v380
    %v413 = vsel %vm349, %v295, %v381
    %v414 = vsel %vm350, %v297, %v382
    %v415 = vsel %vm351, %v301, %v383
    %v416 = vsel %vm352, %v303, %v384
    %v417 = vsel %vm353, %v307, %v385
    %v418 = vsel %vm354, %v309, %v386
    %v419 = vsel %vm355, %v313, %v387
    %v420 = vsel %vm356, %v315, %v388
    %v421 = vsel %vm357, %v319, %v389
    %v422 = vsel %vm358, %v321, %v390
    %v423 = vsel %vm359, %v325, %v391
    %v424 = vsel %vm360, %v327, %v392
    %v425 = vld [vmem:[%s3] sm:$0xff]
    %v426 = vld [vmem:[%s3 + $0x8] sm:$0xff]
    %v427 = vld [vmem:[%s3 + $0x10] sm:$0xff]
    %v428 = vld [vmem:[%s3 + $0x18] sm:$0xff]
    %v429 = vld [vmem:[%s3 + $0x20] sm:$0xff]
    %v430 = vld [vmem:[%s3 + $0x28] sm:$0xff]
    %v431 = vld [vmem:[%s3 + $0x30] sm:$0xff]
    %v432 = vld [vmem:[%s3 + $0x38] sm:$0xff]
    %v433 = vld [vmem:[%s3 + $0x40] sm:$0xff]
    %v434 = vld [vmem:[%s3 + $0x48] sm:$0xff]
    %v435 = vld [vmem:[%s3 + $0x50] sm:$0xff]
    %v436 = vld [vmem:[%s3 + $0x58] sm:$0xff]
    %v437 = vld [vmem:[%s3 + $0x60] sm:$0xff]
    %v438 = vld [vmem:[%s3 + $0x68] sm:$0xff]
    %v439 = vld [vmem:[%s3 + $0x70] sm:$0xff]
    %v440 = vld [vmem:[%s3 + $0x78] sm:$0xff]
    %v441 = vld [vmem:[%s3 + $0x80] sm:$0xff]
    %v442 = vld [vmem:[%s3 + $0x88] sm:$0xff]
    %v443 = vld [vmem:[%s3 + $0x90] sm:$0xff]
    %v444 = vld [vmem:[%s3 + $0x98] sm:$0xff]
    %v445 = vld [vmem:[%s3 + $0xa0] sm:$0xff]
    %v446 = vld [vmem:[%s3 + $0xa8] sm:$0xff]
    %v447 = vld [vmem:[%s3 + $0xb0] sm:$0xff]
    %v448 = vld [vmem:[%s3 + $0xb8] sm:$0xff]
    %v449 = vld [vmem:[%s3 + $0xc0] sm:$0xff]
    %v450 = vld [vmem:[%s3 + $0xc8] sm:$0xff]
    %v451 = vld [vmem:[%s3 + $0xd0] sm:$0xff]
    %v452 = vld [vmem:[%s3 + $0xd8] sm:$0xff]
    %v453 = vld [vmem:[%s3 + $0xe0] sm:$0xff]
    %v454 = vld [vmem:[%s3 + $0xe8] sm:$0xff]
    %v455 = vld [vmem:[%s3 + $0xf0] sm:$0xff]
    %v456 = vld [vmem:[%s3 + $0xf8] sm:$0xff]
    %v457 = vld [vmem:[#allocation2] sm:$0xff]
    %vm458 = vcmask 64512
    %v460 = vsel %vm458, %v79, 0
    %v463 = vsel %vm458, %v80, 0
    %v466 = vsel %vm458, %v81, 0
    %v469 = vsel %vm458, %v82, 0
    %v472 = vsel %vm458, %v83, 0
    %v475 = vsel %vm458, %v84, 0
    %v478 = vsel %vm458, %v85, 0
    %v481 = vsel %vm458, %v86, 0
    %v484 = vsel %vm458, %v87, 0
    %v487 = vsel %vm458, %v88, 0
    %v490 = vsel %vm458, %v89, 0
    %v493 = vsel %vm458, %v90, 0
    %v496 = vsel %vm458, %v91, 0
    %v499 = vsel %vm458, %v92, 0
    %v502 = vsel %vm458, %v93, 0
    %v505 = vsel %vm458, %v94, 0
    %507 = vmatprep.subr.mxu0 0.0
    %508 = vmatpush1.msra.mxu0 %v457
    %509 = vmatprep.subr.mxu0 0.0
    %510 = vmatpush1.msra.mxu0 0.0
    %511 = vmatprep.subr.mxu0 0.0
    %512 = vmatpush1.msra.mxu0 0.0
    %513 = vmatprep.subr.mxu0 0.0
    %514 = vmatpush1.msra.mxu0 0.0
    %515 = vmatprep.subr.mxu0 0.0
    %516 = vmatpush1.msra.mxu0 0.0
    %517 = vmatprep.subr.mxu0 0.0
    %518 = vmatpush1.msra.mxu0 0.0
    %519 = vmatprep.subr.mxu0 0.0
    %520 = vmatpush1.msra.mxu0 0.0
    %521 = vmatprep.subr.mxu0 0.0
    %522 = vmatpush1.msra.mxu0 0.0
    %523 = vmatprep.subr.mxu0 0.0
    %524 = vmatpush1.msra.mxu0 0.0
    %525 = vmatprep.subr.mxu0 0.0
    %526 = vmatpush1.msra.mxu0 0.0
    %527 = vmatprep.subr.mxu0 0.0
    %528 = vmatpush1.msra.mxu0 0.0
    %529 = vmatprep.subr.mxu0 0.0
    %530 = vmatpush1.msra.mxu0 0.0
    %531 = vmatprep.subr.mxu0 0.0
    %532 = vmatpush1.msra.mxu0 0.0
    %533 = vmatprep.subr.mxu0 0.0
    %534 = vmatpush1.msra.mxu0 0.0
    %535 = vmatprep.subr.mxu0 0.0
    %536 = vmatpush1.msra.mxu0 0.0
    %537 = vmatprep.subr.mxu0 0.0
    %538 = vmatpush1.msra.mxu0 0.0
    %539 = vmatprep.subr.mxu0 0.0
    %540 = vmatpush1.msra.mxu0 0.0
    %541 = vmatprep.subr.mxu0 0.0
    %542 = vmatpush1.msra.mxu0 0.0
    %543 = vmatprep.subr.mxu0 0.0
    %544 = vmatpush1.msra.mxu0 0.0
    %545 = vmatprep.subr.mxu0 0.0
    %546 = vmatpush1.msra.mxu0 0.0
    %547 = vmatprep.subr.mxu0 0.0
    %548 = vmatpush1.msra.mxu0 0.0
    %549 = vmatprep.subr.mxu0 0.0
    %550 = vmatpush1.msra.mxu0 0.0
    %551 = vmatprep.subr.mxu0 0.0
    %552 = vmatpush1.msra.mxu0 0.0
    %553 = vmatprep.subr.mxu0 0.0
    %554 = vmatpush1.msra.mxu0 0.0
    %555 = vmatprep.subr.mxu0 0.0
    %556 = vmatpush1.msra.mxu0 0.0
    %557 = vmatprep.subr.mxu0 0.0
    %558 = vmatpush1.msra.mxu0 0.0
    %559 = vmatprep.subr.mxu0 0.0
    %560 = vmatpush1.msra.mxu0 0.0
    %561 = vmatprep.subr.mxu0 0.0
    %562 = vmatpush1.msra.mxu0 0.0
    %563 = vmatprep.subr.mxu0 0.0
    %564 = vmatpush1.msra.mxu0 0.0
    %565 = vmatprep.subr.mxu0 0.0
    %566 = vmatpush1.msra.mxu0 0.0
    %567 = vmatprep.subr.mxu0 0.0
    %568 = vmatpush1.msra.mxu0 0.0
    %569 = vmatprep.subr.mxu0 0.0
    %570 = vmatpush1.msra.mxu0 0.0
    %571 = vmatprep.mubr.f32.mxu0 0.0
    %572 = vmatmul.mubr.f32.gmra.mrb[0].mxu0 %v460
    %v573 = vpop.f32.mrb[0].mxu0
    %v574 = vadd.f32 0.0, %v573
    %v575 = vpop.f32.mrb[0].mxu0
    %576 = vmatprep.mubr.f32.mxu0 0.0
    %577 = vmatmul.mubr.f32.gmra.mrb[0].mxu0 %v463
    %v578 = vpop.f32.mrb[0].mxu0
    %v579 = vadd.f32 0.0, %v578
    %v580 = vpop.f32.mrb[0].mxu0
    %581 = vmatprep.mubr.f32.mxu0 0.0
    %582 = vmatmul.mubr.f32.gmra.mrb[0].mxu0 %v466
    %v583 = vpop.f32.mrb[0].mxu0
    %v584 = vadd.f32 0.0, %v583
    %v585 = vpop.f32.mrb[0].mxu0
    %586 = vmatprep.mubr.f32.mxu0 0.0
    %587 = vmatmul.mubr.f32.gmra.mrb[0].mxu0 %v469
    %v588 = vpop.f32.mrb[0].mxu0
    %v589 = vadd.f32 0.0, %v588
    %v590 = vpop.f32.mrb[0].mxu0
    %591 = vmatprep.mubr.f32.mxu0 0.0
    %592 = vmatmul.mubr.f32.gmra.mrb[0].mxu0 %v472
    %v593 = vpop.f32.mrb[0].mxu0
    %v594 = vadd.f32 0.0, %v593
    %v595 = vpop.f32.mrb[0].mxu0
    %596 = vmatprep.mubr.f32.mxu0 0.0
    %597 = vmatmul.mubr.f32.gmra.mrb[0].mxu0 %v475
    %v598 = vpop.f32.mrb[0].mxu0
    %v599 = vadd.f32 0.0, %v598
    %v600 = vpop.f32.mrb[0].mxu0
    %601 = vmatprep.mubr.f32.mxu0 0.0
    %602 = vmatmul.mubr.f32.gmra.mrb[0].mxu0 %v478
    %v603 = vpop.f32.mrb[0].mxu0
    %v604 = vadd.f32 0.0, %v603
    %v605 = vpop.f32.mrb[0].mxu0
    %606 = vmatprep.mubr.f32.mxu0 0.0
    %607 = vmatmul.mubr.f32.gmra.mrb[0].mxu0 %v481
    %v608 = vpop.f32.mrb[0].mxu0
    %v609 = vadd.f32 0.0, %v608
    %v610 = vpop.f32.mrb[0].mxu0
    %611 = vmatprep.mubr.f32.mxu0 0.0
    %612 = vmatmul.mubr.f32.gmra.mrb[0].mxu0 %v484
    %v613 = vpop.f32.mrb[0].mxu0
    %v614 = vadd.f32 0.0, %v613
    %v615 = vpop.f32.mrb[0].mxu0
    %616 = vmatprep.mubr.f32.mxu0 0.0
    %617 = vmatmul.mubr.f32.gmra.mrb[0].mxu0 %v487
    %v618 = vpop.f32.mrb[0].mxu0
    %v619 = vadd.f32 0.0, %v618
    %v620 = vpop.f32.mrb[0].mxu0
    %621 = vmatprep.mubr.f32.mxu0 0.0
    %622 = vmatmul.mubr.f32.gmra.mrb[0].mxu0 %v490
    %v623 = vpop.f32.mrb[0].mxu0
    %v624 = vadd.f32 0.0, %v623
    %v625 = vpop.f32.mrb[0].mxu0
    %626 = vmatprep.mubr.f32.mxu0 0.0
    %627 = vmatmul.mubr.f32.gmra.mrb[0].mxu0 %v493
    %v628 = vpop.f32.mrb[0].mxu0
    %v629 = vadd.f32 0.0, %v628
    %v630 = vpop.f32.mrb[0].mxu0
    %631 = vmatprep.mubr.f32.mxu0 0.0
    %632 = vmatmul.mubr.f32.gmra.mrb[0].mxu0 %v496
    %v633 = vpop.f32.mrb[0].mxu0
    %v634 = vadd.f32 0.0, %v633
    %v635 = vpop.f32.mrb[0].mxu0
    %636 = vmatprep.mubr.f32.mxu0 0.0
    %637 = vmatmul.mubr.f32.gmra.mrb[0].mxu0 %v499
    %v638 = vpop.f32.mrb[0].mxu0
    %v639 = vadd.f32 0.0, %v638
    %v640 = vpop.f32.mrb[0].mxu0
    %641 = vmatprep.mubr.f32.mxu0 0.0
    %642 = vmatmul.mubr.f32.gmra.mrb[0].mxu0 %v502
    %v643 = vpop.f32.mrb[0].mxu0
    %v644 = vadd.f32 0.0, %v643
    %v645 = vpop.f32.mrb[0].mxu0
    %646 = vmatprep.mubr.f32.mxu0 0.0
    %647 = vmatmul.mubr.f32.gmra.mrb[0].mxu0 %v505
    %v648 = vpop.f32.mrb[0].mxu0
    %v649 = vadd.f32 0.0, %v648
    %v650 = vpop.f32.mrb[0].mxu0
    %651 = vdwg.mxu0
    %652 = vmatprep.subr.mxu0 0.0
    %653 = vmatpush1.msra.mxu0 %v425
    %654 = vmatprep.subr.mxu0 0.0
    %655 = vmatpush1.msra.mxu0 %v426
    %656 = vmatprep.subr.mxu0 0.0
    %657 = vmatpush1.msra.mxu0 %v427
    %658 = vmatprep.subr.mxu0 0.0
    %659 = vmatpush1.msra.mxu0 %v428
    %660 = vmatprep.subr.mxu0 0.0
    %661 = vmatpush1.msra.mxu0 %v429
    %662 = vmatprep.subr.mxu0 0.0
    %663 = vmatpush1.msra.mxu0 %v430
    %664 = vmatprep.subr.mxu0 0.0
    %665 = vmatpush1.msra.mxu0 %v431
    %666 = vmatprep.subr.mxu0 0.0
    %667 = vmatpush1.msra.mxu0 %v432
    %668 = vmatprep.subr.mxu0 0.0
    %669 = vmatpush1.msra.mxu0 %v433
    %670 = vmatprep.subr.mxu0 0.0
    %671 = vmatpush1.msra.mxu0 %v434
    %672 = vmatprep.subr.mxu0 0.0
    %673 = vmatpush1.msra.mxu0 %v435
    %674 = vmatprep.subr.mxu0 0.0
    %675 = vmatpush1.msra.mxu0 %v436
    %676 = vmatprep.subr.mxu0 0.0
    %677 = vmatpush1.msra.mxu0 %v437
    %678 = vmatprep.subr.mxu0 0.0
    %679 = vmatpush1.msra.mxu0 %v438
    %680 = vmatprep.subr.mxu0 0.0
    %681 = vmatpush1.msra.mxu0 %v439
    %682 = vmatprep.subr.mxu0 0.0
    %683 = vmatpush1.msra.mxu0 %v440
    %684 = vmatprep.subr.mxu0 0.0
    %685 = vmatpush1.msra.mxu0 %v441
    %686 = vmatprep.subr.mxu0 0.0
    %687 = vmatpush1.msra.mxu0 %v442
    %688 = vmatprep.subr.mxu0 0.0
    %689 = vmatpush1.msra.mxu0 %v443
    %690 = vmatprep.subr.mxu0 0.0
    %691 = vmatpush1.msra.mxu0 %v444
    %692 = vmatprep.subr.mxu0 0.0
    %693 = vmatpush1.msra.mxu0 %v445
    %694 = vmatprep.subr.mxu0 0.0
    %695 = vmatpush1.msra.mxu0 %v446
    %696 = vmatprep.subr.mxu0 0.0
    %697 = vmatpush1.msra.mxu0 %v447
    %698 = vmatprep.subr.mxu0 0.0
    %699 = vmatpush1.msra.mxu0 %v448
    %700 = vmatprep.subr.mxu0 0.0
    %701 = vmatpush1.msra.mxu0 %v449
    %702 = vmatprep.subr.mxu0 0.0
    %703 = vmatpush1.msra.mxu0 %v450
    %704 = vmatprep.subr.mxu0 0.0
    %705 = vmatpush1.msra.mxu0 %v451
    %706 = vmatprep.subr.mxu0 0.0
    %707 = vmatpush1.msra.mxu0 %v452
    %708 = vmatprep.subr.mxu0 0.0
    %709 = vmatpush1.msra.mxu0 %v453
    %710 = vmatprep.subr.mxu0 0.0
    %711 = vmatpush1.msra.mxu0 %v454
    %712 = vmatprep.subr.mxu0 0.0
    %713 = vmatpush1.msra.mxu0 %v455
    %714 = vmatprep.subr.mxu0 0.0
    %715 = vmatpush1.msra.mxu0 %v456
    %716 = vmatprep.mubr.f32.mxu0 %v394
    %717 = vmatmul.mubr.f32.gmra.mrb[0].mxu0 %v393
    %v718 = vpop.f32.mrb[0].mxu0
    %v719 = vadd.f32 %v574, %v718
    %v720 = vpop.f32.mrb[0].mxu0
    %721 = vmatprep.mubr.f32.mxu0 %v396
    %722 = vmatmul.mubr.f32.gmra.mrb[0].mxu0 %v395
    %v723 = vpop.f32.mrb[0].mxu0
    %v724 = vadd.f32 %v579, %v723
    %v725 = vpop.f32.mrb[0].mxu0
    %726 = vmatprep.mubr.f32.mxu0 %v398
    %727 = vmatmul.mubr.f32.gmra.mrb[0].mxu0 %v397
    %v728 = vpop.f32.mrb[0].mxu0
    %v729 = vadd.f32 %v584, %v728
    %v730 = vpop.f32.mrb[0].mxu0
    %731 = vmatprep.mubr.f32.mxu0 %v400
    %732 = vmatmul.mubr.f32.gmra.mrb[0].mxu0 %v399
    %v733 = vpop.f32.mrb[0].mxu0
    %v734 = vadd.f32 %v589, %v733
    %v735 = vpop.f32.mrb[0].mxu0
    %736 = vmatprep.mubr.f32.mxu0 %v402
    %737 = vmatmul.mubr.f32.gmra.mrb[0].mxu0 %v401
    %v738 = vpop.f32.mrb[0].mxu0
    %v739 = vadd.f32 %v594, %v738
    %v740 = vpop.f32.mrb[0].mxu0
    %741 = vmatprep.mubr.f32.mxu0 %v404
    %742 = vmatmul.mubr.f32.gmra.mrb[0].mxu0 %v403
    %v743 = vpop.f32.mrb[0].mxu0
    %v744 = vadd.f32 %v599, %v743
    %v745 = vpop.f32.mrb[0].mxu0
    %746 = vmatprep.mubr.f32.mxu0 %v406
    %747 = vmatmul.mubr.f32.gmra.mrb[0].mxu0 %v405
    %v748 = vpop.f32.mrb[0].mxu0
    %v749 = vadd.f32 %v604, %v748
    %v750 = vpop.f32.mrb[0].mxu0
    %751 = vmatprep.mubr.f32.mxu0 %v408
    %752 = vmatmul.mubr.f32.gmra.mrb[0].mxu0 %v407
    %v753 = vpop.f32.mrb[0].mxu0
    %v754 = vadd.f32 %v609, %v753
    %v755 = vpop.f32.mrb[0].mxu0
    %756 = vmatprep.mubr.f32.mxu0 %v410
    %757 = vmatmul.mubr.f32.gmra.mrb[0].mxu0 %v409
    %v758 = vpop.f32.mrb[0].mxu0
    %v759 = vadd.f32 %v614, %v758
    %v760 = vpop.f32.mrb[0].mxu0
    %761 = vmatprep.mubr.f32.mxu0 %v412
    %762 = vmatmul.mubr.f32.gmra.mrb[0].mxu0 %v411
    %v763 = vpop.f32.mrb[0].mxu0
    %v764 = vadd.f32 %v619, %v763
    %v765 = vpop.f32.mrb[0].mxu0
    %766 = vmatprep.mubr.f32.mxu0 %v414
    %767 = vmatmul.mubr.f32.gmra.mrb[0].mxu0 %v413
    %v768 = vpop.f32.mrb[0].mxu0
    %v769 = vadd.f32 %v624, %v768
    %v770 = vpop.f32.mrb[0].mxu0
    %771 = vmatprep.mubr.f32.mxu0 %v416
    %772 = vmatmul.mubr.f32.gmra.mrb[0].mxu0 %v415
    %v773 = vpop.f32.mrb[0].mxu0
    %v774 = vadd.f32 %v629, %v773
    %v775 = vpop.f32.mrb[0].mxu0
    %776 = vmatprep.mubr.f32.mxu0 %v418
    %777 = vmatmul.mubr.f32.gmra.mrb[0].mxu0 %v417
    %v778 = vpop.f32.mrb[0].mxu0
    %v779 = vadd.f32 %v634, %v778
    %v780 = vpop.f32.mrb[0].mxu0
    %781 = vmatprep.mubr.f32.mxu0 %v420
    %782 = vmatmul.mubr.f32.gmra.mrb[0].mxu0 %v419
    %v783 = vpop.f32.mrb[0].mxu0
    %v784 = vadd.f32 %v639, %v783
    %v785 = vpop.f32.mrb[0].mxu0
    %786 = vmatprep.mubr.f32.mxu0 %v422
    %787 = vmatmul.mubr.f32.gmra.mrb[0].mxu0 %v421
    %v788 = vpop.f32.mrb[0].mxu0
    %v789 = vadd.f32 %v644, %v788
    %v790 = vpop.f32.mrb[0].mxu0
    %791 = vmatprep.mubr.f32.mxu0 %v424
    %792 = vmatmul.mubr.f32.gmra.mrb[0].mxu0 %v423
    %v793 = vpop.f32.mrb[0].mxu0
    %v794 = vadd.f32 %v649, %v793
    %v795 = vpop.f32.mrb[0].mxu0
    %796 = vdwg.mxu0
    %v797 = vadd.f32 %v719, %v96
    %v798 = vadd.f32 %v724, %v96
    %v799 = vadd.f32 %v729, %v96
    %v800 = vadd.f32 %v734, %v96
    %v801 = vadd.f32 %v739, %v96
    %v802 = vadd.f32 %v744, %v96
    %v803 = vadd.f32 %v749, %v96
    %v804 = vadd.f32 %v754, %v96
    %v805 = vadd.f32 %v759, %v96
    %v806 = vadd.f32 %v764, %v96
    %v807 = vadd.f32 %v769, %v96
    %v808 = vadd.f32 %v774, %v96
    %v809 = vadd.f32 %v779, %v96
    %v810 = vadd.f32 %v784, %v96
    %v811 = vadd.f32 %v789, %v96
    %v812 = vadd.f32 %v794, %v96
    %v813 = vadd.f32 %v797, %v798
    %v814 = vadd.f32 %v813, %v799
    %v815 = vadd.f32 %v814, %v800
    %v816 = vadd.f32 %v815, %v801
    %v817 = vadd.f32 %v816, %v802
    %v818 = vadd.f32 %v817, %v803
    %v819 = vadd.f32 %v818, %v804
    %v820 = vadd.f32 %v819, %v805
    %v821 = vadd.f32 %v820, %v806
    %v822 = vadd.f32 %v821, %v807
    %v823 = vadd.f32 %v822, %v808
    %v824 = vadd.f32 %v823, %v809
    %v825 = vadd.f32 %v824, %v810
    %v826 = vadd.f32 %v825, %v811
    %v827 = vadd.f32 %v826, %v812
    %v828 = vrot.slane %v827, 4
    %v829 = vadd.f32 %v827, %v828
    %v830 = vrot.slane %v829, 2
    %v831 = vadd.f32 %v829, %v830
    %v832 = vrot.slane %v831, 1
    %v833 = vadd.f32 %v831, %v832
    %v834 = vrcp.pop 128.0
    %v835 = vmul.f32 %v833, %v834
    %v836 = vsub.f32 %v797, %v835
    %v837 = vsub.f32 %v798, %v835
    %v838 = vsub.f32 %v799, %v835
    %v839 = vsub.f32 %v800, %v835
    %v840 = vsub.f32 %v801, %v835
    %v841 = vsub.f32 %v802, %v835
    %v842 = vsub.f32 %v803, %v835
    %v843 = vsub.f32 %v804, %v835
    %v844 = vsub.f32 %v805, %v835
    %v845 = vsub.f32 %v806, %v835
    %v846 = vsub.f32 %v807, %v835
    %v847 = vsub.f32 %v808, %v835
    %v848 = vsub.f32 %v809, %v835
    %v849 = vsub.f32 %v810, %v835
    %v850 = vsub.f32 %v811, %v835
    %v851 = vsub.f32 %v812, %v835
    %v852 = vmul.f32 %v836, %v836
    %v853 = vmul.f32 %v837, %v837
    %v854 = vmul.f32 %v838, %v838
    %v855 = vmul.f32 %v839, %v839
    %v856 = vmul.f32 %v840, %v840
    %v857 = vmul.f32 %v841, %v841
    %v858 = vmul.f32 %v842, %v842
    %v859 = vmul.f32 %v843, %v843
    %v860 = vmul.f32 %v844, %v844
    %v861 = vmul.f32 %v845, %v845
    %v862 = vmul.f32 %v846, %v846
    %v863 = vmul.f32 %v847, %v847
    %v864 = vmul.f32 %v848, %v848
    %v865 = vmul.f32 %v849, %v849
    %v866 = vmul.f32 %v850, %v850
    %v867 = vmul.f32 %v851, %v851
    %v868 = vadd.f32 %v852, %v853
    %v869 = vadd.f32 %v868, %v854
    %v870 = vadd.f32 %v869, %v855
    %v871 = vadd.f32 %v870, %v856
    %v872 = vadd.f32 %v871, %v857
    %v873 = vadd.f32 %v872, %v858
    %v874 = vadd.f32 %v873, %v859
    %v875 = vadd.f32 %v874, %v860
    %v876 = vadd.f32 %v875, %v861
    %v877 = vadd.f32 %v876, %v862
    %v878 = vadd.f32 %v877, %v863
    %v879 = vadd.f32 %v878, %v864
    %v880 = vadd.f32 %v879, %v865
    %v881 = vadd.f32 %v880, %v866
    %v882 = vadd.f32 %v881, %v867
    %v883 = vrot.slane %v882, 4
    %v884 = vadd.f32 %v882, %v883
    %v885 = vrot.slane %v884, 2
    %v886 = vadd.f32 %v884, %v885
    %v887 = vrot.slane %v886, 1
    %v888 = vadd.f32 %v886, %v887
    %v889 = vmul.f32 %v888, %v834
    %v890 = vadd.f32 %v889, 1e-05
    %v891 = vrsqrt.pop %v890
    %v892 = vmul.f32 %v98, %v891
    %v893 = vmul.f32 %v835, %v892
    %v894 = vsub.f32 %v100, %v893
    %v895 = vmul.f32 %v797, %v892
    %v896 = vmul.f32 %v798, %v892
    %v897 = vmul.f32 %v799, %v892
    %v898 = vmul.f32 %v800, %v892
    %v899 = vmul.f32 %v801, %v892
    %v900 = vmul.f32 %v802, %v892
    %v901 = vmul.f32 %v803, %v892
    %v902 = vmul.f32 %v804, %v892
    %v903 = vmul.f32 %v805, %v892
    %v904 = vmul.f32 %v806, %v892
    %v905 = vmul.f32 %v807, %v892
    %v906 = vmul.f32 %v808, %v892
    %v907 = vmul.f32 %v809, %v892
    %v908 = vmul.f32 %v810, %v892
    %v909 = vmul.f32 %v811, %v892
    %v910 = vmul.f32 %v812, %v892
    %v911 = vadd.f32 %v895, %v894
    %v912 = vadd.f32 %v896, %v894
    %v913 = vadd.f32 %v897, %v894
    %v914 = vadd.f32 %v898, %v894
    %v915 = vadd.f32 %v899, %v894
    %v916 = vadd.f32 %v900, %v894
    %v917 = vadd.f32 %v901, %v894
    %v918 = vadd.f32 %v902, %v894
    %v919 = vadd.f32 %v903, %v894
    %v920 = vadd.f32 %v904, %v894
    %v921 = vadd.f32 %v905, %v894
    %v922 = vadd.f32 %v906, %v894
    %v923 = vadd.f32 %v907, %v894
    %v924 = vadd.f32 %v908, %v894
    %v925 = vadd.f32 %v909, %v894
    %v926 = vadd.f32 %v910, %v894
    %vm927 = vcmp.gt.f32.partialorder %v911, 0.0
    %vm928 = vcmp.gt.f32.partialorder %v912, 0.0
    %vm929 = vcmp.gt.f32.partialorder %v913, 0.0
    %vm930 = vcmp.gt.f32.partialorder %v914, 0.0
    %vm931 = vcmp.gt.f32.partialorder %v915, 0.0
    %vm932 = vcmp.gt.f32.partialorder %v916, 0.0
    %vm933 = vcmp.gt.f32.partialorder %v917, 0.0
    %vm934 = vcmp.gt.f32.partialorder %v918, 0.0
    %vm935 = vcmp.gt.f32.partialorder %v919, 0.0
    %vm936 = vcmp.gt.f32.partialorder %v920, 0.0
    %vm937 = vcmp.gt.f32.partialorder %v921, 0.0
    %vm938 = vcmp.gt.f32.partialorder %v922, 0.0
    %vm939 = vcmp.gt.f32.partialorder %v923, 0.0
    %vm940 = vcmp.gt.f32.partialorder %v924, 0.0
    %vm941 = vcmp.gt.f32.partialorder %v925, 0.0
    %vm942 = vcmp.gt.f32.partialorder %v926, 0.0
    %v943 = vmul.f32 %v911, 0.01
    %v944 = vmul.f32 %v912, 0.01
    %v945 = vmul.f32 %v913, 0.01
    %v946 = vmul.f32 %v914, 0.01
    %v947 = vmul.f32 %v915, 0.01
    %v948 = vmul.f32 %v916, 0.01
    %v949 = vmul.f32 %v917, 0.01
    %v950 = vmul.f32 %v918, 0.01
    %v951 = vmul.f32 %v919, 0.01
    %v952 = vmul.f32 %v920, 0.01
    %v953 = vmul.f32 %v921, 0.01
    %v954 = vmul.f32 %v922, 0.01
    %v955 = vmul.f32 %v923, 0.01
    %v956 = vmul.f32 %v924, 0.01
    %v957 = vmul.f32 %v925, 0.01
    %v958 = vmul.f32 %v926, 0.01
    %v959 = vsel %vm927, %v911, %v943
    %v960 = vsel %vm928, %v912, %v944
    %v961 = vsel %vm929, %v913, %v945
    %v962 = vsel %vm930, %v914, %v946
    %v963 = vsel %vm931, %v915, %v947
    %v964 = vsel %vm932, %v916, %v948
    %v965 = vsel %vm933, %v917, %v949
    %v966 = vsel %vm934, %v918, %v950
    %v967 = vsel %vm935, %v919, %v951
    %v968 = vsel %vm936, %v920, %v952
    %v969 = vsel %vm937, %v921, %v953
    %v970 = vsel %vm938, %v922, %v954
    %v971 = vsel %vm939, %v923, %v955
    %v972 = vsel %vm940, %v924, %v956
    %v973 = vsel %vm941, %v925, %v957
    %v974 = vsel %vm942, %v926, %v958
    %v975 = vld [vmem:[#allocation4] sm:$0xff]
    %v976 = vld [vmem:[#allocation4 + $0x8] sm:$0xff]
    %v977 = vld [vmem:[#allocation4 + $0x10] sm:$0xff]
    %v978 = vld [vmem:[#allocation4 + $0x18] sm:$0xff]
    %v979 = vld [vmem:[#allocation4 + $0x20] sm:$0xff]
    %v980 = vld [vmem:[#allocation4 + $0x28] sm:$0xff]
    %v981 = vld [vmem:[#allocation4 + $0x30] sm:$0xff]
    %v982 = vld [vmem:[#allocation4 + $0x38] sm:$0xff]
    %v983 = vld [vmem:[#allocation4 + $0x40] sm:$0xff]
    %v984 = vld [vmem:[#allocation4 + $0x48] sm:$0xff]
    %v985 = vld [vmem:[#allocation4 + $0x50] sm:$0xff]
    %v986 = vld [vmem:[#allocation4 + $0x58] sm:$0xff]
    %v987 = vld [vmem:[#allocation4 + $0x60] sm:$0xff]
    %v988 = vld [vmem:[#allocation4 + $0x68] sm:$0xff]
    %v989 = vld [vmem:[#allocation4 + $0x70] sm:$0xff]
    %v990 = vld [vmem:[#allocation4 + $0x78] sm:$0xff]
    %991 = vmatprep.subr.mxu0 0.0
    %992 = vmatpush1.msra.mxu0 %v975
    %993 = vmatprep.subr.mxu0 0.0
    %994 = vmatpush1.msra.mxu0 %v976
    %995 = vmatprep.subr.mxu0 0.0
    %996 = vmatpush1.msra.mxu0 %v977
    %997 = vmatprep.subr.mxu0 0.0
    %998 = vmatpush1.msra.mxu0 %v978
    %999 = vmatprep.subr.mxu0 0.0
    %1000 = vmatpush1.msra.mxu0 %v979
    %1001 = vmatprep.subr.mxu0 0.0
    %1002 = vmatpush1.msra.mxu0 %v980
    %1003 = vmatprep.subr.mxu0 0.0
    %1004 = vmatpush1.msra.mxu0 %v981
    %1005 = vmatprep.subr.mxu0 0.0
    %1006 = vmatpush1.msra.mxu0 %v982
    %1007 = vmatprep.subr.mxu0 0.0
    %1008 = vmatpush1.msra.mxu0 %v983
    %1009 = vmatprep.subr.mxu0 0.0
    %1010 = vmatpush1.msra.mxu0 %v984
    %1011 = vmatprep.subr.mxu0 0.0
    %1012 = vmatpush1.msra.mxu0 %v985
    %1013 = vmatprep.subr.mxu0 0.0
    %1014 = vmatpush1.msra.mxu0 %v986
    %1015 = vmatprep.subr.mxu0 0.0
    %1016 = vmatpush1.msra.mxu0 %v987
    %1017 = vmatprep.subr.mxu0 0.0
    %1018 = vmatpush1.msra.mxu0 %v988
    %1019 = vmatprep.subr.mxu0 0.0
    %1020 = vmatpush1.msra.mxu0 %v989
    %1021 = vmatprep.subr.mxu0 0.0
    %1022 = vmatpush1.msra.mxu0 %v990
    %1023 = vmatprep.subr.mxu0 0.0
    %1024 = vmatpush1.msra.mxu0 0.0
    %1025 = vmatprep.subr.mxu0 0.0
    %1026 = vmatpush1.msra.mxu0 0.0
    %1027 = vmatprep.subr.mxu0 0.0
    %1028 = vmatpush1.msra.mxu0 0.0
    %1029 = vmatprep.subr.mxu0 0.0
    %1030 = vmatpush1.msra.mxu0 0.0
    %1031 = vmatprep.subr.mxu0 0.0
    %1032 = vmatpush1.msra.mxu0 0.0
    %1033 = vmatprep.subr.mxu0 0.0
    %1034 = vmatpush1.msra.mxu0 0.0
    %1035 = vmatprep.subr.mxu0 0.0
    %1036 = vmatpush1.msra.mxu0 0.0
    %1037 = vmatprep.subr.mxu0 0.0
    %1038 = vmatpush1.msra.mxu0 0.0
    %1039 = vmatprep.subr.mxu0 0.0
    %1040 = vmatpush1.msra.mxu0 0.0
    %1041 = vmatprep.subr.mxu0 0.0
    %1042 = vmatpush1.msra.mxu0 0.0
    %1043 = vmatprep.subr.mxu0 0.0
    %1044 = vmatpush1.msra.mxu0 0.0
    %1045 = vmatprep.subr.mxu0 0.0
    %1046 = vmatpush1.msra.mxu0 0.0
    %1047 = vmatprep.subr.mxu0 0.0
    %1048 = vmatpush1.msra.mxu0 0.0
    %1049 = vmatprep.subr.mxu0 0.0
    %1050 = vmatpush1.msra.mxu0 0.0
    %1051 = vmatprep.subr.mxu0 0.0
    %1052 = vmatpush1.msra.mxu0 0.0
    %1053 = vmatprep.subr.mxu0 0.0
    %1054 = vmatpush1.msra.mxu0 0.0
    %1055 = vmatprep.mubr.f32.mxu0 0.0
    %1056 = vmatmul.mubr.f32.gmra.mrb[0].mxu0 %v959
    %v1057 = vpop.f32.mrb[0].mxu0
    %v1058 = vadd.f32 %v97, %v1057
    %v1059 = vpop.f32.mrb[0].mxu0
    %1060 = vmatprep.mubr.f32.mxu0 0.0
    %1061 = vmatmul.mubr.f32.gmra.mrb[0].mxu0 %v960
    %v1062 = vpop.f32.mrb[0].mxu0
    %v1063 = vadd.f32 %v97, %v1062
    %v1064 = vpop.f32.mrb[0].mxu0
    %1065 = vmatprep.mubr.f32.mxu0 0.0
    %1066 = vmatmul.mubr.f32.gmra.mrb[0].mxu0 %v961
    %v1067 = vpop.f32.mrb[0].mxu0
    %v1068 = vadd.f32 %v97, %v1067
    %v1069 = vpop.f32.mrb[0].mxu0
    %1070 = vmatprep.mubr.f32.mxu0 0.0
    %1071 = vmatmul.mubr.f32.gmra.mrb[0].mxu0 %v962
    %v1072 = vpop.f32.mrb[0].mxu0
    %v1073 = vadd.f32 %v97, %v1072
    %v1074 = vpop.f32.mrb[0].mxu0
    %1075 = vmatprep.mubr.f32.mxu0 0.0
    %1076 = vmatmul.mubr.f32.gmra.mrb[0].mxu0 %v963
    %v1077 = vpop.f32.mrb[0].mxu0
    %v1078 = vadd.f32 %v97, %v1077
    %v1079 = vpop.f32.mrb[0].mxu0
    %1080 = vmatprep.mubr.f32.mxu0 0.0
    %1081 = vmatmul.mubr.f32.gmra.mrb[0].mxu0 %v964
    %v1082 = vpop.f32.mrb[0].mxu0
    %v1083 = vadd.f32 %v97, %v1082
    %v1084 = vpop.f32.mrb[0].mxu0
    %1085 = vmatprep.mubr.f32.mxu0 0.0
    %1086 = vmatmul.mubr.f32.gmra.mrb[0].mxu0 %v965
    %v1087 = vpop.f32.mrb[0].mxu0
    %v1088 = vadd.f32 %v97, %v1087
    %v1089 = vpop.f32.mrb[0].mxu0
    %1090 = vmatprep.mubr.f32.mxu0 0.0
    %1091 = vmatmul.mubr.f32.gmra.mrb[0].mxu0 %v966
    %v1092 = vpop.f32.mrb[0].mxu0
    %v1093 = vadd.f32 %v97, %v1092
    %v1094 = vpop.f32.mrb[0].mxu0
    %1095 = vmatprep.mubr.f32.mxu0 0.0
    %1096 = vmatmul.mubr.f32.gmra.mrb[0].mxu0 %v967
    %v1097 = vpop.f32.mrb[0].mxu0
    %v1098 = vadd.f32 %v97, %v1097
    %v1099 = vpop.f32.mrb[0].mxu0
    %1100 = vmatprep.mubr.f32.mxu0 0.0
    %1101 = vmatmul.mubr.f32.gmra.mrb[0].mxu0 %v968
    %v1102 = vpop.f32.mrb[0].mxu0
    %v1103 = vadd.f32 %v97, %v1102
    %v1104 = vpop.f32.mrb[0].mxu0
    %1105 = vmatprep.mubr.f32.mxu0 0.0
    %1106 = vmatmul.mubr.f32.gmra.mrb[0].mxu0 %v969
    %v1107 = vpop.f32.mrb[0].mxu0
    %v1108 = vadd.f32 %v97, %v1107
    %v1109 = vpop.f32.mrb[0].mxu0
    %1110 = vmatprep.mubr.f32.mxu0 0.0
    %1111 = vmatmul.mubr.f32.gmra.mrb[0].mxu0 %v970
    %v1112 = vpop.f32.mrb[0].mxu0
    %v1113 = vadd.f32 %v97, %v1112
    %v1114 = vpop.f32.mrb[0].mxu0
    %1115 = vmatprep.mubr.f32.mxu0 0.0
    %1116 = vmatmul.mubr.f32.gmra.mrb[0].mxu0 %v971
    %v1117 = vpop.f32.mrb[0].mxu0
    %v1118 = vadd.f32 %v97, %v1117
    %v1119 = vpop.f32.mrb[0].mxu0
    %1120 = vmatprep.mubr.f32.mxu0 0.0
    %1121 = vmatmul.mubr.f32.gmra.mrb[0].mxu0 %v972
    %v1122 = vpop.f32.mrb[0].mxu0
    %v1123 = vadd.f32 %v97, %v1122
    %v1124 = vpop.f32.mrb[0].mxu0
    %1125 = vmatprep.mubr.f32.mxu0 0.0
    %1126 = vmatmul.mubr.f32.gmra.mrb[0].mxu0 %v973
    %v1127 = vpop.f32.mrb[0].mxu0
    %v1128 = vadd.f32 %v97, %v1127
    %v1129 = vpop.f32.mrb[0].mxu0
    %1130 = vmatprep.mubr.f32.mxu0 0.0
    %1131 = vmatmul.mubr.f32.gmra.mrb[0].mxu0 %v974
    %v1132 = vpop.f32.mrb[0].mxu0
    %v1133 = vadd.f32 %v97, %v1132
    %v1134 = vpop.f32.mrb[0].mxu0
    %1135 = vdwg.mxu0
    %v1136 = vadd.f32 %v1058, %v1063
    %v1137 = vadd.f32 %v1136, %v1068
    %v1138 = vadd.f32 %v1137, %v1073
    %v1139 = vadd.f32 %v1138, %v1078
    %v1140 = vadd.f32 %v1139, %v1083
    %v1141 = vadd.f32 %v1140, %v1088
    %v1142 = vadd.f32 %v1141, %v1093
    %v1143 = vadd.f32 %v1142, %v1098
    %v1144 = vadd.f32 %v1143, %v1103
    %v1145 = vadd.f32 %v1144, %v1108
    %v1146 = vadd.f32 %v1145, %v1113
    %v1147 = vadd.f32 %v1146, %v1118
    %v1148 = vadd.f32 %v1147, %v1123
    %v1149 = vadd.f32 %v1148, %v1128
    %v1150 = vadd.f32 %v1149, %v1133
    %v1151 = vrot.slane %v1150, 4
    %v1152 = vadd.f32 %v1150, %v1151
    %v1153 = vrot.slane %v1152, 2
    %v1154 = vadd.f32 %v1152, %v1153
    %v1155 = vrot.slane %v1154, 1
    %v1156 = vadd.f32 %v1154, %v1155
    %v1157 = vmul.f32 %v1156, %v834
    %v1158 = vsub.f32 %v1058, %v1157
    %v1159 = vsub.f32 %v1063, %v1157
    %v1160 = vsub.f32 %v1068, %v1157
    %v1161 = vsub.f32 %v1073, %v1157
    %v1162 = vsub.f32 %v1078, %v1157
    %v1163 = vsub.f32 %v1083, %v1157
    %v1164 = vsub.f32 %v1088, %v1157
    %v1165 = vsub.f32 %v1093, %v1157
    %v1166 = vsub.f32 %v1098, %v1157
    %v1167 = vsub.f32 %v1103, %v1157
    %v1168 = vsub.f32 %v1108, %v1157
    %v1169 = vsub.f32 %v1113, %v1157
    %v1170 = vsub.f32 %v1118, %v1157
    %v1171 = vsub.f32 %v1123, %v1157
    %v1172 = vsub.f32 %v1128, %v1157
    %v1173 = vsub.f32 %v1133, %v1157
    %v1174 = vmul.f32 %v1158, %v1158
    %v1175 = vmul.f32 %v1159, %v1159
    %v1176 = vmul.f32 %v1160, %v1160
    %v1177 = vmul.f32 %v1161, %v1161
    %v1178 = vmul.f32 %v1162, %v1162
    %v1179 = vmul.f32 %v1163, %v1163
    %v1180 = vmul.f32 %v1164, %v1164
    %v1181 = vmul.f32 %v1165, %v1165
    %v1182 = vmul.f32 %v1166, %v1166
    %v1183 = vmul.f32 %v1167, %v1167
    %v1184 = vmul.f32 %v1168, %v1168
    %v1185 = vmul.f32 %v1169, %v1169
    %v1186 = vmul.f32 %v1170, %v1170
    %v1187 = vmul.f32 %v1171, %v1171
    %v1188 = vmul.f32 %v1172, %v1172
    %v1189 = vmul.f32 %v1173, %v1173
    %v1190 = vadd.f32 %v1174, %v1175
    %v1191 = vadd.f32 %v1190, %v1176
    %v1192 = vadd.f32 %v1191, %v1177
    %v1193 = vadd.f32 %v1192, %v1178
    %v1194 = vadd.f32 %v1193, %v1179
    %v1195 = vadd.f32 %v1194, %v1180
    %v1196 = vadd.f32 %v1195, %v1181
    %v1197 = vadd.f32 %v1196, %v1182
    %v1198 = vadd.f32 %v1197, %v1183
    %v1199 = vadd.f32 %v1198, %v1184
    %v1200 = vadd.f32 %v1199, %v1185
    %v1201 = vadd.f32 %v1200, %v1186
    %v1202 = vadd.f32 %v1201, %v1187
    %v1203 = vadd.f32 %v1202, %v1188
    %v1204 = vadd.f32 %v1203, %v1189
    %v1205 = vrot.slane %v1204, 4
    %v1206 = vadd.f32 %v1204, %v1205
    %v1207 = vrot.slane %v1206, 2
    %v1208 = vadd.f32 %v1206, %v1207
    %v1209 = vrot.slane %v1208, 1
    %v1210 = vadd.f32 %v1208, %v1209
    %v1211 = vmul.f32 %v1210, %v834
    %v1212 = vadd.f32 %v1211, 1e-05
    %v1213 = vrsqrt.pop %v1212
    %v1214 = vmul.f32 %v99, %v1213
    %v1215 = vmul.f32 %v1157, %v1214
    %v1216 = vsub.f32 %v101, %v1215
    %v1217 = vmul.f32 %v1058, %v1214
    %v1218 = vmul.f32 %v1063, %v1214
    %v1219 = vmul.f32 %v1068, %v1214
    %v1220 = vmul.f32 %v1073, %v1214
    %v1221 = vmul.f32 %v1078, %v1214
    %v1222 = vmul.f32 %v1083, %v1214
    %v1223 = vmul.f32 %v1088, %v1214
    %v1224 = vmul.f32 %v1093, %v1214
    %v1225 = vmul.f32 %v1098, %v1214
    %v1226 = vmul.f32 %v1103, %v1214
    %v1227 = vmul.f32 %v1108, %v1214
    %v1228 = vmul.f32 %v1113, %v1214
    %v1229 = vmul.f32 %v1118, %v1214
    %v1230 = vmul.f32 %v1123, %v1214
    %v1231 = vmul.f32 %v1128, %v1214
    %v1232 = vmul.f32 %v1133, %v1214
    %v1233 = vadd.f32 %v1217, %v1216
    %v1234 = vadd.f32 %v1218, %v1216
    %v1235 = vadd.f32 %v1219, %v1216
    %v1236 = vadd.f32 %v1220, %v1216
    %v1237 = vadd.f32 %v1221, %v1216
    %v1238 = vadd.f32 %v1222, %v1216
    %v1239 = vadd.f32 %v1223, %v1216
    %v1240 = vadd.f32 %v1224, %v1216
    %v1241 = vadd.f32 %v1225, %v1216
    %v1242 = vadd.f32 %v1226, %v1216
    %v1243 = vadd.f32 %v1227, %v1216
    %v1244 = vadd.f32 %v1228, %v1216
    %v1245 = vadd.f32 %v1229, %v1216
    %v1246 = vadd.f32 %v1230, %v1216
    %v1247 = vadd.f32 %v1231, %v1216
    %v1248 = vadd.f32 %v1232, %v1216
    %vm1249 = vcmp.gt.f32.partialorder %v1233, 0.0
    %vm1250 = vcmp.gt.f32.partialorder %v1234, 0.0
    %vm1251 = vcmp.gt.f32.partialorder %v1235, 0.0
    %vm1252 = vcmp.gt.f32.partialorder %v1236, 0.0
    %vm1253 = vcmp.gt.f32.partialorder %v1237, 0.0
    %vm1254 = vcmp.gt.f32.partialorder %v1238, 0.0
    %vm1255 = vcmp.gt.f32.partialorder %v1239, 0.0
    %vm1256 = vcmp.gt.f32.partialorder %v1240, 0.0
    %vm1257 = vcmp.gt.f32.partialorder %v1241, 0.0
    %vm1258 = vcmp.gt.f32.partialorder %v1242, 0.0
    %vm1259 = vcmp.gt.f32.partialorder %v1243, 0.0
    %vm1260 = vcmp.gt.f32.partialorder %v1244, 0.0
    %vm1261 = vcmp.gt.f32.partialorder %v1245, 0.0
    %vm1262 = vcmp.gt.f32.partialorder %v1246, 0.0
    %vm1263 = vcmp.gt.f32.partialorder %v1247, 0.0
    %vm1264 = vcmp.gt.f32.partialorder %v1248, 0.0
    %v1265 = vmul.f32 %v1233, 0.01
    %v1266 = vmul.f32 %v1234, 0.01
    %v1267 = vmul.f32 %v1235, 0.01
    %v1268 = vmul.f32 %v1236, 0.01
    %v1269 = vmul.f32 %v1237, 0.01
    %v1270 = vmul.f32 %v1238, 0.01
    %v1271 = vmul.f32 %v1239, 0.01
    %v1272 = vmul.f32 %v1240, 0.01
    %v1273 = vmul.f32 %v1241, 0.01
    %v1274 = vmul.f32 %v1242, 0.01
    %v1275 = vmul.f32 %v1243, 0.01
    %v1276 = vmul.f32 %v1244, 0.01
    %v1277 = vmul.f32 %v1245, 0.01
    %v1278 = vmul.f32 %v1246, 0.01
    %v1279 = vmul.f32 %v1247, 0.01
    %v1280 = vmul.f32 %v1248, 0.01
    %v1281 = vsel %vm1249, %v1233, %v1265
    %v1282 = vsel %vm1250, %v1234, %v1266
    %v1283 = vsel %vm1251, %v1235, %v1267
    %v1284 = vsel %vm1252, %v1236, %v1268
    %v1285 = vsel %vm1253, %v1237, %v1269
    %v1286 = vsel %vm1254, %v1238, %v1270
    %v1287 = vsel %vm1255, %v1239, %v1271
    %v1288 = vsel %vm1256, %v1240, %v1272
    %v1289 = vsel %vm1257, %v1241, %v1273
    %v1290 = vsel %vm1258, %v1242, %v1274
    %v1291 = vsel %vm1259, %v1243, %v1275
    %v1292 = vsel %vm1260, %v1244, %v1276
    %v1293 = vsel %vm1261, %v1245, %v1277
    %v1294 = vsel %vm1262, %v1246, %v1278
    %v1295 = vsel %vm1263, %v1247, %v1279
    %v1296 = vsel %vm1264, %v1248, %v1280
    %v1297 = vmul.f32 %v1281, %v102
    %v1298 = vmul.f32 %v1282, %v102
    %v1299 = vmul.f32 %v1283, %v102
    %v1300 = vmul.f32 %v1284, %v102
    %v1301 = vmul.f32 %v1285, %v102
    %v1302 = vmul.f32 %v1286, %v102
    %v1303 = vmul.f32 %v1287, %v102
    %v1304 = vmul.f32 %v1288, %v102
    %v1305 = vmul.f32 %v1289, %v102
    %v1306 = vmul.f32 %v1290, %v102
    %v1307 = vmul.f32 %v1291, %v102
    %v1308 = vmul.f32 %v1292, %v102
    %v1309 = vmul.f32 %v1293, %v102
    %v1310 = vmul.f32 %v1294, %v102
    %v1311 = vmul.f32 %v1295, %v102
    %v1312 = vmul.f32 %v1296, %v102
    %1313 = vadd.xlane.f32.xlu0 %v1297
    %v1314 = vpop.xlane.xlu0 %1313
    %1315 = vadd.xlane.f32.xlu0 %v1298
    %v1316 = vpop.xlane.xlu0 %1315
    %1317 = vadd.xlane.f32.xlu0 %v1299
    %v1318 = vpop.xlane.xlu0 %1317
    %1319 = vadd.xlane.f32.xlu0 %v1300
    %v1320 = vpop.xlane.xlu0 %1319
    %1321 = vadd.xlane.f32.xlu0 %v1301
    %v1322 = vpop.xlane.xlu0 %1321
    %1323 = vadd.xlane.f32.xlu0 %v1302
    %v1324 = vpop.xlane.xlu0 %1323
    %1325 = vadd.xlane.f32.xlu0 %v1303
    %v1326 = vpop.xlane.xlu0 %1325
    %1327 = vadd.xlane.f32.xlu0 %v1304
    %v1328 = vpop.xlane.xlu0 %1327
    %1329 = vadd.xlane.f32.xlu0 %v1305
    %v1330 = vpop.xlane.xlu0 %1329
    %1331 = vadd.xlane.f32.xlu0 %v1306
    %v1332 = vpop.xlane.xlu0 %1331
    %1333 = vadd.xlane.f32.xlu0 %v1307
    %v1334 = vpop.xlane.xlu0 %1333
    %1335 = vadd.xlane.f32.xlu0 %v1308
    %v1336 = vpop.xlane.xlu0 %1335
    %1337 = vadd.xlane.f32.xlu0 %v1309
    %v1338 = vpop.xlane.xlu0 %1337
    %1339 = vadd.xlane.f32.xlu0 %v1310
    %v1340 = vpop.xlane.xlu0 %1339
    %1341 = vadd.xlane.f32.xlu0 %v1311
    %v1342 = vpop.xlane.xlu0 %1341
    %1343 = vadd.xlane.f32.xlu0 %v1312
    %v1344 = vpop.xlane.xlu0 %1343
    %v1345 = vadd.f32 %v1314, %v103
    %v1346 = vadd.f32 %v1316, %v103
    %v1347 = vadd.f32 %v1318, %v103
    %v1348 = vadd.f32 %v1320, %v103
    %v1349 = vadd.f32 %v1322, %v103
    %v1350 = vadd.f32 %v1324, %v103
    %v1351 = vadd.f32 %v1326, %v103
    %v1352 = vadd.f32 %v1328, %v103
    %v1353 = vadd.f32 %v1330, %v103
    %v1354 = vadd.f32 %v1332, %v103
    %v1355 = vadd.f32 %v1334, %v103
    %v1356 = vadd.f32 %v1336, %v103
    %v1357 = vadd.f32 %v1338, %v103
    %v1358 = vadd.f32 %v1340, %v103
    %v1359 = vadd.f32 %v1342, %v103
    %v1360 = vadd.f32 %v1344, %v103
    %v1361 = vxor.u32 %v1345, 2147483648
    %v1362 = vxor.u32 %v1346, 2147483648
    %v1363 = vxor.u32 %v1347, 2147483648
    %v1364 = vxor.u32 %v1348, 2147483648
    %v1365 = vxor.u32 %v1349, 2147483648
    %v1366 = vxor.u32 %v1350, 2147483648
    %v1367 = vxor.u32 %v1351, 2147483648
    %v1368 = vxor.u32 %v1352, 2147483648
    %v1369 = vxor.u32 %v1353, 2147483648
    %v1370 = vxor.u32 %v1354, 2147483648
    %v1371 = vxor.u32 %v1355, 2147483648
    %v1372 = vxor.u32 %v1356, 2147483648
    %v1373 = vxor.u32 %v1357, 2147483648
    %v1374 = vxor.u32 %v1358, 2147483648
    %v1375 = vxor.u32 %v1359, 2147483648
    %v1376 = vxor.u32 %v1360, 2147483648
    %v1377 = vmul.f32 %v1361, 1.442695
    %v1378 = vpow.pop %v1377
    %v1379 = vmul.f32 %v1362, 1.442695
    %v1380 = vpow.pop %v1379
    %v1381 = vmul.f32 %v1363, 1.442695
    %v1382 = vpow.pop %v1381
    %v1383 = vmul.f32 %v1364, 1.442695
    %v1384 = vpow.pop %v1383
    %v1385 = vmul.f32 %v1365, 1.442695
    %v1386 = vpow.pop %v1385
    %v1387 = vmul.f32 %v1366, 1.442695
    %v1388 = vpow.pop %v1387
    %v1389 = vmul.f32 %v1367, 1.442695
    %v1390 = vpow.pop %v1389
    %v1391 = vmul.f32 %v1368, 1.442695
    %v1392 = vpow.pop %v1391
    %v1393 = vmul.f32 %v1369, 1.442695
    %v1394 = vpow.pop %v1393
    %v1395 = vmul.f32 %v1370, 1.442695
    %v1396 = vpow.pop %v1395
    %v1397 = vmul.f32 %v1371, 1.442695
    %v1398 = vpow.pop %v1397
    %v1399 = vmul.f32 %v1372, 1.442695
    %v1400 = vpow.pop %v1399
    %v1401 = vmul.f32 %v1373, 1.442695
    %v1402 = vpow.pop %v1401
    %v1403 = vmul.f32 %v1374, 1.442695
    %v1404 = vpow.pop %v1403
    %v1405 = vmul.f32 %v1375, 1.442695
    %v1406 = vpow.pop %v1405
    %v1407 = vmul.f32 %v1376, 1.442695
    %v1408 = vpow.pop %v1407
    %v1409 = vadd.f32 %v1378, 1.0
    %v1410 = vadd.f32 %v1380, 1.0
    %v1411 = vadd.f32 %v1382, 1.0
    %v1412 = vadd.f32 %v1384, 1.0
    %v1413 = vadd.f32 %v1386, 1.0
    %v1414 = vadd.f32 %v1388, 1.0
    %v1415 = vadd.f32 %v1390, 1.0
    %v1416 = vadd.f32 %v1392, 1.0
    %v1417 = vadd.f32 %v1394, 1.0
    %v1418 = vadd.f32 %v1396, 1.0
    %v1419 = vadd.f32 %v1398, 1.0
    %v1420 = vadd.f32 %v1400, 1.0
    %v1421 = vadd.f32 %v1402, 1.0
    %v1422 = vadd.f32 %v1404, 1.0
    %v1423 = vadd.f32 %v1406, 1.0
    %v1424 = vadd.f32 %v1408, 1.0
    %v1425 = vrcp.pop %v1409
    %v1426 = vmul.f32 1.0, %v1425
    %v1427 = vrcp.pop %v1410
    %v1428 = vmul.f32 1.0, %v1427
    %v1429 = vrcp.pop %v1411
    %v1430 = vmul.f32 1.0, %v1429
    %v1431 = vrcp.pop %v1412
    %v1432 = vmul.f32 1.0, %v1431
    %v1433 = vrcp.pop %v1413
    %v1434 = vmul.f32 1.0, %v1433
    %v1435 = vrcp.pop %v1414
    %v1436 = vmul.f32 1.0, %v1435
    %v1437 = vrcp.pop %v1415
    %v1438 = vmul.f32 1.0, %v1437
    %v1439 = vrcp.pop %v1416
    %v1440 = vmul.f32 1.0, %v1439
    %v1441 = vrcp.pop %v1417
    %v1442 = vmul.f32 1.0, %v1441
    %v1443 = vrcp.pop %v1418
    %v1444 = vmul.f32 1.0, %v1443
    %v1445 = vrcp.pop %v1419
    %v1446 = vmul.f32 1.0, %v1445
    %v1447 = vrcp.pop %v1420
    %v1448 = vmul.f32 1.0, %v1447
    %v1449 = vrcp.pop %v1421
    %v1450 = vmul.f32 1.0, %v1449
    %v1451 = vrcp.pop %v1422
    %v1452 = vmul.f32 1.0, %v1451
    %v1453 = vrcp.pop %v1423
    %v1454 = vmul.f32 1.0, %v1453
    %v1455 = vrcp.pop %v1424
    %v1456 = vmul.f32 1.0, %v1455
    %1458 = vset.pattern.permute.xlu0 0
    %1459 = vperm.xlu0 %1458, %v1426
    %v1460 = vpop.permute.xlu0 %1459
    %1463 = vset.pattern.permute.xlu0 0
    %1464 = vperm.xlu0 %1463, %v1428
    %v1465 = vpop.permute.xlu0 %1464
    %1468 = vset.pattern.permute.xlu0 0
    %1469 = vperm.xlu0 %1468, %v1430
    %v1470 = vpop.permute.xlu0 %1469
    %1473 = vset.pattern.permute.xlu0 0
    %1474 = vperm.xlu0 %1473, %v1432
    %v1475 = vpop.permute.xlu0 %1474
    %1478 = vset.pattern.permute.xlu0 0
    %1479 = vperm.xlu0 %1478, %v1434
    %v1480 = vpop.permute.xlu0 %1479
    %1483 = vset.pattern.permute.xlu0 0
    %1484 = vperm.xlu0 %1483, %v1436
    %v1485 = vpop.permute.xlu0 %1484
    %1488 = vset.pattern.permute.xlu0 0
    %1489 = vperm.xlu0 %1488, %v1438
    %v1490 = vpop.permute.xlu0 %1489
    %1493 = vset.pattern.permute.xlu0 0
    %1494 = vperm.xlu0 %1493, %v1440
    %v1495 = vpop.permute.xlu0 %1494
    %1498 = vset.pattern.permute.xlu0 0
    %1499 = vperm.xlu0 %1498, %v1442
    %v1500 = vpop.permute.xlu0 %1499
    %1503 = vset.pattern.permute.xlu0 0
    %1504 = vperm.xlu0 %1503, %v1444
    %v1505 = vpop.permute.xlu0 %1504
    %1508 = vset.pattern.permute.xlu0 0
    %1509 = vperm.xlu0 %1508, %v1446
    %v1510 = vpop.permute.xlu0 %1509
    %1513 = vset.pattern.permute.xlu0 0
    %1514 = vperm.xlu0 %1513, %v1448
    %v1515 = vpop.permute.xlu0 %1514
    %1518 = vset.pattern.permute.xlu0 0
    %1519 = vperm.xlu0 %1518, %v1450
    %v1520 = vpop.permute.xlu0 %1519
    %1523 = vset.pattern.permute.xlu0 0
    %1524 = vperm.xlu0 %1523, %v1452
    %v1525 = vpop.permute.xlu0 %1524
    %1528 = vset.pattern.permute.xlu0 0
    %1529 = vperm.xlu0 %1528, %v1454
    %v1530 = vpop.permute.xlu0 %1529
    %1533 = vset.pattern.permute.xlu0 0
    %1534 = vperm.xlu0 %1533, %v1456
    %v1535 = vpop.permute.xlu0 %1534
    %1537 = vst [vmem:[%s7] sm:$0xff] %v1460
    %1538 = vst [vmem:[%s7 + $0x8] sm:$0xff] %v1465
    %1539 = vst [vmem:[%s7 + $0x10] sm:$0xff] %v1470
    %1540 = vst [vmem:[%s7 + $0x18] sm:$0xff] %v1475
    %1541 = vst [vmem:[%s7 + $0x20] sm:$0xff] %v1480
    %1542 = vst [vmem:[%s7 + $0x28] sm:$0xff] %v1485
    %1543 = vst [vmem:[%s7 + $0x30] sm:$0xff] %v1490
    %1544 = vst [vmem:[%s7 + $0x38] sm:$0xff] %v1495
    %1545 = vst [vmem:[%s7 + $0x40] sm:$0xff] %v1500
    %1546 = vst [vmem:[%s7 + $0x48] sm:$0xff] %v1505
    %1547 = vst [vmem:[%s7 + $0x50] sm:$0xff] %v1510
    %1548 = vst [vmem:[%s7 + $0x58] sm:$0xff] %v1515
    %1549 = vst [vmem:[%s7 + $0x60] sm:$0xff] %v1520
    %1550 = vst [vmem:[%s7 + $0x68] sm:$0xff] %v1525
    %1551 = vst [vmem:[%s7 + $0x70] sm:$0xff] %v1530
    %1552 = vst [vmem:[%s7 + $0x78] sm:$0xff] %v1535
    // Predicated region
    $region42: #{critic_forward.1} parent=1 // pred_check
      _
    $region43: #{critic_forward.1} parent=1 // pred_check_branch
      %1554 = sbr.rel (0) target = $region45
    $region44: #{critic_forward.1} parent=1 // pred_region
      _
    $region45: #{critic_forward.1} parent=1 // pred_fallthru
      _
    // Predicated region
    $region46: #{critic_forward.1} parent=1 // pred_check
      _
    $region47: #{critic_forward.1} parent=1 // pred_check_branch
      %1556 = sbr.rel (0) target = $region49
    $region48: #{critic_forward.1} parent=1 // pred_region
      _
    $region49: #{critic_forward.1} parent=1 // pred_fallthru
      _
    %1557 = vsyncpa [#allocation3], 1
    %1558 = vsyncpa [#allocation5], 1

</llo_original>
